<compile_context>
chip_gen: v5e
topology: v5e:2x2
jax: 0.10.0
libtpu: 0.0.40
codegen_flags: <defaults>
</compile_context>

<pallas_src>
import functools

import jax
import jax.numpy as jnp
from jax import lax
from jax.experimental import pallas as pl
from jax.experimental.pallas import tpu as pltpu


# --------------------------------------------------------------------------
# Host-side helpers: upsample matrix, tap masks/shifts, weight packing
# --------------------------------------------------------------------------
def _upsample_matrix(h_in, w_in):
    """Bilinear x2 align_corners upsample expressed as a (h*w, 4*h*w) matrix
    (Kronecker product of the per-axis interpolation operators)."""
    def axis_mat(n_in):
        n_out = 2 * n_in
        src = jnp.arange(n_out, dtype=jnp.float32) * (n_in - 1) / (n_out - 1)
        i0 = jnp.clip(jnp.floor(src).astype(jnp.int32), 0, n_in - 1)
        i1 = jnp.clip(i0 + 1, 0, n_in - 1)
        f = src - i0.astype(jnp.float32)
        rows = jnp.arange(n_out)
        a = jnp.zeros((n_out, n_in), jnp.float32)
        a = a.at[rows, i0].add(1.0 - f)
        a = a.at[rows, i1].add(f)
        return a
    return jnp.kron(axis_mat(h_in), axis_mat(w_in)).T  # (h*w, 4*h*w)


def _tap_masks_and_shifts(hh, ww):
    """For each of the 9 conv taps (dh, dw): the static lane-roll amount and a
    0/1 mask (1, hh*ww) marking in-bounds source positions."""
    m = hh * ww
    rows = jnp.arange(m, dtype=jnp.int32) // ww
    cols = jnp.arange(m, dtype=jnp.int32) % ww
    masks, shifts = [], []
    for dh in (-1, 0, 1):
        for dw in (-1, 0, 1):
            shifts.append(int((-(dh * ww + dw)) % m))
            ok = ((rows + dh >= 0) & (rows + dh < hh) &
                  (cols + dw >= 0) & (cols + dw < ww))
            masks.append(ok.astype(jnp.float32))
    return jnp.stack(masks).reshape(9, 1, m), tuple(shifts)


def _conv_weight_mat(w4d, cin_pad):
    """(Cout, Cin, kh, kw) f32 -> (Cout, kh*kw*cin_pad) bf16, K ordered as
    (kh, kw)-major, Cin-minor to match the in-kernel tap concatenation."""
    cout, cin, kh, kw = w4d.shape
    if cin_pad > cin:
        w4d = jnp.pad(w4d, ((0, 0), (0, cin_pad - cin), (0, 0), (0, 0)))
    w = jnp.transpose(w4d, (0, 2, 3, 1)).reshape(cout, kh * kw * cin_pad)
    return w.astype(jnp.bfloat16)


def _shortcut_as_3x3(w1x1, cin_pad):
    """(Cout, Cin, 1, 1) 1x1 conv embedded at the center tap of a 3x3 weight
    so it can share the im2col operand / matmul with the first 3x3 conv."""
    cout, cin, _, _ = w1x1.shape
    w3 = jnp.zeros((cout, cin, 3, 3), w1x1.dtype)
    w3 = w3.at[:, :, 1, 1].set(w1x1[:, :, 0, 0])
    return _conv_weight_mat(w3, cin_pad)


def _pack_residual_block(p, cin_pad):
    """Returns (w_main, b_main, w2, b2):
       w_main (2*Cout, 9*cin_pad) = [conv1 3x3 ; shortcut 1x1 as center tap]."""
    cout = p["c1"]["b"].shape[0]
    w_main = jnp.concatenate(
        [_conv_weight_mat(p["c1"]["w"], cin_pad),
         _shortcut_as_3x3(p["cs"]["w"], cin_pad)], axis=0)
    b_main = jnp.concatenate([p["c1"]["b"], p["cs"]["b"]]).reshape(2 * cout, 1)
    w2 = _conv_weight_mat(p["c2"]["w"], cout)
    b2 = p["c2"]["b"].reshape(cout, 1)
    return w_main, b_main, w2, b2


def _const_map(ndims):
    return lambda b: (0,) * ndims


# --------------------------------------------------------------------------
# The fused DecoderBlock kernel (one grid step per batch sample)
# --------------------------------------------------------------------------
def _decoder_block_kernel(
    x_ref, skip_ref, up_ref, mask_ref,
    wm1_ref, bm1_ref, w21_ref, b21_ref,
    wm2_ref, bm2_ref, w22_ref, b22_ref,
    o_ref, *, shifts,
):
    # ---- bilinear x2 upsample (align_corners) as one GEMM, then concat ----
    up = jnp.dot(x_ref[0], up_ref[...], preferred_element_type=jnp.float32)
    a = jnp.concatenate([up, skip_ref[0]], axis=0)        # (Cin1, M) f32

    # ---- in-VMEM im2col: 9 static lane rolls + boundary masks -------------
    def im2col(v):                                        # (C, M) -> (9C, M) bf16
        pieces = []
        for t, shift in enumerate(shifts):
            shifted = v if shift == 0 else pltpu.roll(v, shift=shift, axis=1)
            pieces.append(shifted * mask_ref[t])          # mask is (1, M)
        return jnp.concatenate(pieces, axis=0).astype(jnp.bfloat16)

    def residual_block(v, wm_ref, bm_ref, w2_ref, b2_ref):
        cout = w2_ref.shape[0]
        # conv1 (3x3) + shortcut (1x1-as-center-tap) fused into ONE matmul.
        hs = jnp.dot(wm_ref[...], im2col(v),
                     preferred_element_type=jnp.float32) + bm_ref[...]
        h = jnp.maximum(hs[:cout], 0.0)                   # conv1 + BN + ReLU
        s = hs[cout:]                                     # shortcut + BN
        h2 = jnp.dot(w2_ref[...], im2col(h),
                     preferred_element_type=jnp.float32) + b2_ref[...]
        return jnp.maximum(h2 + s, 0.0)                   # add + ReLU

    y = residual_block(a, wm1_ref, bm1_ref, w21_ref, b21_ref)
    y = residual_block(y, wm2_ref, bm2_ref, w22_ref, b22_ref)
    o_ref[0] = y.astype(o_ref.dtype)                      # lane-dense store


# --------------------------------------------------------------------------
# Wrapper: DecoderBlock.forward
# --------------------------------------------------------------------------
def decoder_block(inputs_nchw, skip_nchw, params):
    B, C0, H, W = inputs_nchw.shape
    Bs, C1, HH, WW = skip_nchw.shape
    assert Bs == B and HH == 2 * H and WW == 2 * W
    M_in, M = H * W, HH * WW

    cout = params["r1"]["c1"]["b"].shape[0]
    # Pad skip channels to a sublane multiple so in-kernel concats stay aligned
    # (C0 and cout are already multiples of 8 in this configuration).
    c1_pad = -(-C1 // 8) * 8
    cin1 = C0 + c1_pad

    # Flattened NCHW (channels on sublanes, spatial on lanes): no transposes.
    x_flat = inputs_nchw.reshape(B, C0, M_in)
    skip_flat = skip_nchw.reshape(B, C1, M)
    if c1_pad != C1:
        skip_flat = jnp.pad(skip_flat, ((0, 0), (0, c1_pad - C1), (0, 0)))

    up_mat = _upsample_matrix(H, W)                   # (M_in, M) f32
    masks, shifts = _tap_masks_and_shifts(HH, WW)     # (9, 1, M), 9 static ints

    wm1, bm1, w21, b21 = _pack_residual_block(params["r1"], cin1)
    wm2, bm2, w22, b22 = _pack_residual_block(params["r2"], cout)

    args = [x_flat, skip_flat, up_mat, masks,
            wm1, bm1, w21, b21, wm2, bm2, w22, b22]

    in_specs = [
        pl.BlockSpec((1, C0, M_in), lambda b: (b, 0, 0)),
        pl.BlockSpec((1, c1_pad, M), lambda b: (b, 0, 0)),
    ] + [pl.BlockSpec(a.shape, _const_map(a.ndim)) for a in args[2:]]

    out_flat = pl.pallas_call(
        functools.partial(_decoder_block_kernel, shifts=shifts),
        out_shape=jax.ShapeDtypeStruct((B, cout, M), jnp.float32),
        grid=(B,),
        in_specs=in_specs,
        out_specs=pl.BlockSpec((1, cout, M), lambda b: (b, 0, 0)),
        compiler_params=pltpu.CompilerParams(
            dimension_semantics=("parallel",)),       # both TCs on v7x
    )(*args)
    return out_flat.reshape(B, cout, HH, WW)


# --------------------------------------------------------------------------
# Deterministic parameter construction (Conv2d + folded eval-mode BatchNorm2d)
# --------------------------------------------------------------------------
def make_conv_bn(key, cin, cout, ksize):
    k1, k2, k3, k4, k5, k6 = jax.random.split(key, 6)
    w = jax.random.normal(k1, (cout, cin, ksize, ksize), jnp.float32) * 0.1
    b = jax.random.normal(k2, (cout,), jnp.float32) * 0.1
    gamma = 1.0 + 0.1 * jax.random.normal(k3, (cout,), jnp.float32)
    beta = 0.1 * jax.random.normal(k4, (cout,), jnp.float32)
    run_mean = 0.1 * jax.random.normal(k5, (cout,), jnp.float32)
    run_var = 1.0 + 0.1 * jax.random.uniform(k6, (cout,), jnp.float32)
    eps = 1e-5
    scale = gamma / jnp.sqrt(run_var + eps)
    return dict(w=w * scale[:, None, None, None],
                b=(b - run_mean) * scale + beta)


def make_residual_block_params(key, in_c, out_c):
    k1, k2, k3 = jax.random.split(key, 3)
    return dict(c1=make_conv_bn(k1, in_c, out_c, 3),
                c2=make_conv_bn(k2, out_c, out_c, 3),
                cs=make_conv_bn(k3, in_c, out_c, 1))


# --------------------------------------------------------------------------
# Pure-JAX (XLA) reference of the same forward pass, for a numerical check
# --------------------------------------------------------------------------
def _upsample_ref(x):
    _, _, h, w = x.shape
    def coords(n_in):
        n_out = 2 * n_in
        src = jnp.arange(n_out, dtype=jnp.float32) * (n_in - 1) / (n_out - 1)
        i0 = jnp.clip(jnp.floor(src).astype(jnp.int32), 0, n_in - 1)
        i1 = jnp.clip(i0 + 1, 0, n_in - 1)
        return i0, i1, src - i0.astype(jnp.float32)
    h0, h1, hf = coords(h)
    w0, w1, wf = coords(w)
    xh = (x[:, :, h0, :] * (1.0 - hf)[None, None, :, None]
          + x[:, :, h1, :] * hf[None, None, :, None])
    return (xh[:, :, :, w0] * (1.0 - wf)[None, None, None, :]
            + xh[:, :, :, w1] * wf[None, None, None, :])


def _conv_ref(x, w, b, pad):
    y = lax.conv_general_dilated(
        x, w, window_strides=(1, 1), padding=[(pad, pad), (pad, pad)],
        dimension_numbers=("NCHW", "OIHW", "NCHW"))
    return y + b[None, :, None, None]


def _residual_block_ref(x, p):
    h = jax.nn.relu(_conv_ref(x, p["c1"]["w"], p["c1"]["b"], 1))
    h = _conv_ref(h, p["c2"]["w"], p["c2"]["b"], 1)
    s = _conv_ref(x, p["cs"]["w"], p["cs"]["b"], 0)
    return jax.nn.relu(h + s)


def reference_decoder_block(inputs, skip, params):
    x = _upsample_ref(inputs)
    x = jnp.concatenate([x, skip], axis=1)
    x = _residual_block_ref(x, params["r1"])
    return _residual_block_ref(x, params["r2"])


# --------------------------------------------------------------------------
if __name__ == "__main__":
    key = jax.random.PRNGKey(0)
    k_in, k_skip, k_r1, k_r2 = jax.random.split(key, 4)

    # DecoderBlock(in_c=[8, 4], out_c=8); `inputs` at half the skip resolution.
    in_c = (8, 4)
    out_c = 8
    B, H, W = 2, 8, 8

    inputs = jax.random.normal(k_in, (B, in_c[0], H, W), jnp.float32)        # NCHW
    skip = jax.random.normal(k_skip, (B, in_c[1], 2 * H, 2 * W), jnp.float32)

    params = {
        "r1": make_residual_block_params(k_r1, in_c[0] + in_c[1], out_c),
        "r2": make_residual_block_params(k_r2, out_c, out_c),
    }

    out = jax.jit(decoder_block)(inputs, skip, params)
    out = jax.block_until_ready(out)
    assert out.shape == (B, out_c, 2 * H, 2 * W), out.shape

    # Numerical check vs. an XLA reference (bf16 MXU operands -> loose tol).
    ref = reference_decoder_block(inputs, skip, params)
    rel_l2 = jnp.linalg.norm(out - ref) / (jnp.linalg.norm(ref) + 1e-6)
    assert float(rel_l2) < 5e-2, float(rel_l2)

    print("KERNEL_OK")
</pallas_src>

<mosaic_0001>
module attributes {stable_mosaic.version = 11 : i64} {
  func.func @_decoder_block_kernel(%arg0: i32, %arg1: memref<1x8x64xf32, #tpu.memory_space<vmem>>, %arg2: memref<1x8x256xf32, #tpu.memory_space<vmem>>, %arg3: memref<64x256xf32, #tpu.memory_space<vmem>>, %arg4: memref<9x1x256xf32, #tpu.memory_space<vmem>>, %arg5: memref<16x144xbf16, #tpu.memory_space<vmem>>, %arg6: memref<16x1xf32, #tpu.memory_space<vmem>>, %arg7: memref<8x72xbf16, #tpu.memory_space<vmem>>, %arg8: memref<8x1xf32, #tpu.memory_space<vmem>>, %arg9: memref<16x72xbf16, #tpu.memory_space<vmem>>, %arg10: memref<16x1xf32, #tpu.memory_space<vmem>>, %arg11: memref<8x72xbf16, #tpu.memory_space<vmem>>, %arg12: memref<8x1xf32, #tpu.memory_space<vmem>>, %arg13: memref<1x8x256xf32, #tpu.memory_space<vmem>>) attributes {dimension_semantics = [#tpu.dimension_semantics<parallel>], iteration_bounds = array<i64: 2>, scalar_prefetch = 0 : i64, scratch_operands = 0 : i64, tpu.core_type = #tpu.core_type<tc>, window_params = [{transform_indices = @transform_0, window_bounds = array<i64: 1, 8, 64>}, {transform_indices = @transform_1, window_bounds = array<i64: 1, 8, 256>}, {pipeline_mode = #tpu.pipeline_mode<synchronous>, transform_indices = @transform_2, window_bounds = array<i64: 64, 256>}, {pipeline_mode = #tpu.pipeline_mode<synchronous>, transform_indices = @transform_3, window_bounds = array<i64: 9, 1, 256>}, {pipeline_mode = #tpu.pipeline_mode<synchronous>, transform_indices = @transform_4, window_bounds = array<i64: 16, 144>}, {pipeline_mode = #tpu.pipeline_mode<synchronous>, transform_indices = @transform_5, window_bounds = array<i64: 16, 1>}, {pipeline_mode = #tpu.pipeline_mode<synchronous>, transform_indices = @transform_6, window_bounds = array<i64: 8, 72>}, {pipeline_mode = #tpu.pipeline_mode<synchronous>, transform_indices = @transform_7, window_bounds = array<i64: 8, 1>}, {pipeline_mode = #tpu.pipeline_mode<synchronous>, transform_indices = @transform_8, window_bounds = array<i64: 16, 72>}, {pipeline_mode = #tpu.pipeline_mode<synchronous>, transform_indices = @transform_9, window_bounds = array<i64: 16, 1>}, {pipeline_mode = #tpu.pipeline_mode<synchronous>, transform_indices = @transform_10, window_bounds = array<i64: 8, 72>}, {pipeline_mode = #tpu.pipeline_mode<synchronous>, transform_indices = @transform_11, window_bounds = array<i64: 8, 1>}, {transform_indices = @transform_12, window_bounds = array<i64: 1, 8, 256>}]} {
    %c0 = arith.constant 0 : index
    %c0_0 = arith.constant 0 : index
    %c0_1 = arith.constant 0 : index
    %0 = vector.load %arg1[%c0, %c0_0, %c0_1] : memref<1x8x64xf32, #tpu.memory_space<vmem>>, vector<1x8x64xf32>
    %1 = vector.shape_cast %0 : vector<1x8x64xf32> to vector<8x64xf32>
    %c0_2 = arith.constant 0 : index
    %c0_3 = arith.constant 0 : index
    %2 = vector.load %arg3[%c0_2, %c0_3] : memref<64x256xf32, #tpu.memory_space<vmem>>, vector<64x256xf32>
    %cst = arith.constant dense<0.000000e+00> : vector<8x256xf32>
    %3 = tpu.matmul %1, %2, %cst {dimension_numbers = #tpu.dot_dimension_numbers<[1], [0], [0], [1], [0, 0, 1, 1], [], []>} : vector<8x64xf32>, vector<64x256xf32>, vector<8x256xf32> -> vector<8x256xf32>
    %c0_4 = arith.constant 0 : index
    %c0_5 = arith.constant 0 : index
    %c0_6 = arith.constant 0 : index
    %4 = vector.load %arg2[%c0_4, %c0_5, %c0_6] : memref<1x8x256xf32, #tpu.memory_space<vmem>>, vector<1x8x256xf32>
    %5 = vector.shape_cast %4 : vector<1x8x256xf32> to vector<8x256xf32>
    %6 = tpu.concatenate %3, %5 in 0 : vector<8x256xf32>, vector<8x256xf32> -> vector<16x256xf32>
    %c0_7 = arith.constant 0 : index
    %c0_8 = arith.constant 0 : index
    %7 = vector.load %arg5[%c0_7, %c0_8] : memref<16x144xbf16, #tpu.memory_space<vmem>>, vector<16x144xbf16>
    %c17_i32 = arith.constant 17 : i32
    %8 = tpu.dynamic_rotate %6 by %c17_i32 dim 1 : vector<16x256xf32>, i32 -> vector<16x256xf32>
    %c0_9 = arith.constant 0 : index
    %c0_10 = arith.constant 0 : index
    %c0_11 = arith.constant 0 : index
    %9 = vector.load %arg4[%c0_9, %c0_10, %c0_11] : memref<9x1x256xf32, #tpu.memory_space<vmem>>, vector<1x1x256xf32>
    %10 = vector.shape_cast %9 : vector<1x1x256xf32> to vector<1x256xf32>
    %11 = vector.broadcast %10 : vector<1x256xf32> to vector<16x256xf32>
    %12 = arith.mulf %8, %11 : vector<16x256xf32>
    %c16_i32 = arith.constant 16 : i32
    %13 = tpu.dynamic_rotate %6 by %c16_i32 dim 1 : vector<16x256xf32>, i32 -> vector<16x256xf32>
    %c1 = arith.constant 1 : index
    %c0_12 = arith.constant 0 : index
    %c0_13 = arith.constant 0 : index
    %14 = vector.load %arg4[%c1, %c0_12, %c0_13] : memref<9x1x256xf32, #tpu.memory_space<vmem>>, vector<1x1x256xf32>
    %15 = vector.shape_cast %14 : vector<1x1x256xf32> to vector<1x256xf32>
    %16 = vector.broadcast %15 : vector<1x256xf32> to vector<16x256xf32>
    %17 = arith.mulf %13, %16 : vector<16x256xf32>
    %c15_i32 = arith.constant 15 : i32
    %18 = tpu.dynamic_rotate %6 by %c15_i32 dim 1 : vector<16x256xf32>, i32 -> vector<16x256xf32>
    %c2 = arith.constant 2 : index
    %c0_14 = arith.constant 0 : index
    %c0_15 = arith.constant 0 : index
    %19 = vector.load %arg4[%c2, %c0_14, %c0_15] : memref<9x1x256xf32, #tpu.memory_space<vmem>>, vector<1x1x256xf32>
    %20 = vector.shape_cast %19 : vector<1x1x256xf32> to vector<1x256xf32>
    %21 = vector.broadcast %20 : vector<1x256xf32> to vector<16x256xf32>
    %22 = arith.mulf %18, %21 : vector<16x256xf32>
    %c1_i32 = arith.constant 1 : i32
    %23 = tpu.dynamic_rotate %6 by %c1_i32 dim 1 : vector<16x256xf32>, i32 -> vector<16x256xf32>
    %c3 = arith.constant 3 : index
    %c0_16 = arith.constant 0 : index
    %c0_17 = arith.constant 0 : index
    %24 = vector.load %arg4[%c3, %c0_16, %c0_17] : memref<9x1x256xf32, #tpu.memory_space<vmem>>, vector<1x1x256xf32>
    %25 = vector.shape_cast %24 : vector<1x1x256xf32> to vector<1x256xf32>
    %26 = vector.broadcast %25 : vector<1x256xf32> to vector<16x256xf32>
    %27 = arith.mulf %23, %26 : vector<16x256xf32>
    %c4 = arith.constant 4 : index
    %c0_18 = arith.constant 0 : index
    %c0_19 = arith.constant 0 : index
    %28 = vector.load %arg4[%c4, %c0_18, %c0_19] : memref<9x1x256xf32, #tpu.memory_space<vmem>>, vector<1x1x256xf32>
    %29 = vector.shape_cast %28 : vector<1x1x256xf32> to vector<1x256xf32>
    %30 = vector.broadcast %29 : vector<1x256xf32> to vector<16x256xf32>
    %31 = arith.mulf %6, %30 : vector<16x256xf32>
    %c255_i32 = arith.constant 255 : i32
    %32 = tpu.dynamic_rotate %6 by %c255_i32 dim 1 : vector<16x256xf32>, i32 -> vector<16x256xf32>
    %c5 = arith.constant 5 : index
    %c0_20 = arith.constant 0 : index
    %c0_21 = arith.constant 0 : index
    %33 = vector.load %arg4[%c5, %c0_20, %c0_21] : memref<9x1x256xf32, #tpu.memory_space<vmem>>, vector<1x1x256xf32>
    %34 = vector.shape_cast %33 : vector<1x1x256xf32> to vector<1x256xf32>
    %35 = vector.broadcast %34 : vector<1x256xf32> to vector<16x256xf32>
    %36 = arith.mulf %32, %35 : vector<16x256xf32>
    %c241_i32 = arith.constant 241 : i32
    %37 = tpu.dynamic_rotate %6 by %c241_i32 dim 1 : vector<16x256xf32>, i32 -> vector<16x256xf32>
    %c6 = arith.constant 6 : index
    %c0_22 = arith.constant 0 : index
    %c0_23 = arith.constant 0 : index
    %38 = vector.load %arg4[%c6, %c0_22, %c0_23] : memref<9x1x256xf32, #tpu.memory_space<vmem>>, vector<1x1x256xf32>
    %39 = vector.shape_cast %38 : vector<1x1x256xf32> to vector<1x256xf32>
    %40 = vector.broadcast %39 : vector<1x256xf32> to vector<16x256xf32>
    %41 = arith.mulf %37, %40 : vector<16x256xf32>
    %c240_i32 = arith.constant 240 : i32
    %42 = tpu.dynamic_rotate %6 by %c240_i32 dim 1 : vector<16x256xf32>, i32 -> vector<16x256xf32>
    %c7 = arith.constant 7 : index
    %c0_24 = arith.constant 0 : index
    %c0_25 = arith.constant 0 : index
    %43 = vector.load %arg4[%c7, %c0_24, %c0_25] : memref<9x1x256xf32, #tpu.memory_space<vmem>>, vector<1x1x256xf32>
    %44 = vector.shape_cast %43 : vector<1x1x256xf32> to vector<1x256xf32>
    %45 = vector.broadcast %44 : vector<1x256xf32> to vector<16x256xf32>
    %46 = arith.mulf %42, %45 : vector<16x256xf32>
    %c239_i32 = arith.constant 239 : i32
    %47 = tpu.dynamic_rotate %6 by %c239_i32 dim 1 : vector<16x256xf32>, i32 -> vector<16x256xf32>
    %c8 = arith.constant 8 : index
    %c0_26 = arith.constant 0 : index
    %c0_27 = arith.constant 0 : index
    %48 = vector.load %arg4[%c8, %c0_26, %c0_27] : memref<9x1x256xf32, #tpu.memory_space<vmem>>, vector<1x1x256xf32>
    %49 = vector.shape_cast %48 : vector<1x1x256xf32> to vector<1x256xf32>
    %50 = vector.broadcast %49 : vector<1x256xf32> to vector<16x256xf32>
    %51 = arith.mulf %47, %50 : vector<16x256xf32>
    %52 = tpu.concatenate %12, %17, %22, %27, %31, %36, %41, %46, %51 in 0 : vector<16x256xf32>, vector<16x256xf32>, vector<16x256xf32>, vector<16x256xf32>, vector<16x256xf32>, vector<16x256xf32>, vector<16x256xf32>, vector<16x256xf32>, vector<16x256xf32> -> vector<144x256xf32>
    %53 = arith.truncf %52 : vector<144x256xf32> to vector<144x256xbf16>
    %cst_28 = arith.constant dense<0.000000e+00> : vector<16x256xf32>
    %54 = tpu.matmul %7, %53, %cst_28 {dimension_numbers = #tpu.dot_dimension_numbers<[1], [0], [0], [1], [0, 0, 1, 1], [], []>} : vector<16x144xbf16>, vector<144x256xbf16>, vector<16x256xf32> -> vector<16x256xf32>
    %c0_29 = arith.constant 0 : index
    %c0_30 = arith.constant 0 : index
    %55 = vector.load %arg6[%c0_29, %c0_30] : memref<16x1xf32, #tpu.memory_space<vmem>>, vector<16x1xf32>
    %56 = vector.broadcast %55 : vector<16x1xf32> to vector<16x256xf32>
    %57 = arith.addf %54, %56 : vector<16x256xf32>
    %58 = vector.extract_strided_slice %57 {offsets = [0, 0], sizes = [8, 256], strides = [1, 1]} : vector<16x256xf32> to vector<8x256xf32>
    %cst_31 = arith.constant 0.000000e+00 : f32
    %59 = vector.broadcast %cst_31 : f32 to vector<8x256xf32>
    %60 = arith.maximumf %58, %59 : vector<8x256xf32>
    %61 = vector.extract_strided_slice %57 {offsets = [8, 0], sizes = [8, 256], strides = [1, 1]} : vector<16x256xf32> to vector<8x256xf32>
    %c0_32 = arith.constant 0 : index
    %c0_33 = arith.constant 0 : index
    %62 = vector.load %arg7[%c0_32, %c0_33] : memref<8x72xbf16, #tpu.memory_space<vmem>>, vector<8x72xbf16>
    %c17_i32_34 = arith.constant 17 : i32
    %63 = tpu.dynamic_rotate %60 by %c17_i32_34 dim 1 : vector<8x256xf32>, i32 -> vector<8x256xf32>
    %c0_35 = arith.constant 0 : index
    %c0_36 = arith.constant 0 : index
    %c0_37 = arith.constant 0 : index
    %64 = vector.load %arg4[%c0_35, %c0_36, %c0_37] : memref<9x1x256xf32, #tpu.memory_space<vmem>>, vector<1x1x256xf32>
    %65 = vector.shape_cast %64 : vector<1x1x256xf32> to vector<1x256xf32>
    %66 = vector.broadcast %65 : vector<1x256xf32> to vector<8x256xf32>
    %67 = arith.mulf %63, %66 : vector<8x256xf32>
    %c16_i32_38 = arith.constant 16 : i32
    %68 = tpu.dynamic_rotate %60 by %c16_i32_38 dim 1 : vector<8x256xf32>, i32 -> vector<8x256xf32>
    %c1_39 = arith.constant 1 : index
    %c0_40 = arith.constant 0 : index
    %c0_41 = arith.constant 0 : index
    %69 = vector.load %arg4[%c1_39, %c0_40, %c0_41] : memref<9x1x256xf32, #tpu.memory_space<vmem>>, vector<1x1x256xf32>
    %70 = vector.shape_cast %69 : vector<1x1x256xf32> to vector<1x256xf32>
    %71 = vector.broadcast %70 : vector<1x256xf32> to vector<8x256xf32>
    %72 = arith.mulf %68, %71 : vector<8x256xf32>
    %c15_i32_42 = arith.constant 15 : i32
    %73 = tpu.dynamic_rotate %60 by %c15_i32_42 dim 1 : vector<8x256xf32>, i32 -> vector<8x256xf32>
    %c2_43 = arith.constant 2 : index
    %c0_44 = arith.constant 0 : index
    %c0_45 = arith.constant 0 : index
    %74 = vector.load %arg4[%c2_43, %c0_44, %c0_45] : memref<9x1x256xf32, #tpu.memory_space<vmem>>, vector<1x1x256xf32>
    %75 = vector.shape_cast %74 : vector<1x1x256xf32> to vector<1x256xf32>
    %76 = vector.broadcast %75 : vector<1x256xf32> to vector<8x256xf32>
    %77 = arith.mulf %73, %76 : vector<8x256xf32>
    %c1_i32_46 = arith.constant 1 : i32
    %78 = tpu.dynamic_rotate %60 by %c1_i32_46 dim 1 : vector<8x256xf32>, i32 -> vector<8x256xf32>
    %c3_47 = arith.constant 3 : index
    %c0_48 = arith.constant 0 : index
    %c0_49 = arith.constant 0 : index
    %79 = vector.load %arg4[%c3_47, %c0_48, %c0_49] : memref<9x1x256xf32, #tpu.memory_space<vmem>>, vector<1x1x256xf32>
    %80 = vector.shape_cast %79 : vector<1x1x256xf32> to vector<1x256xf32>
    %81 = vector.broadcast %80 : vector<1x256xf32> to vector<8x256xf32>
    %82 = arith.mulf %78, %81 : vector<8x256xf32>
    %c4_50 = arith.constant 4 : index
    %c0_51 = arith.constant 0 : index
    %c0_52 = arith.constant 0 : index
    %83 = vector.load %arg4[%c4_50, %c0_51, %c0_52] : memref<9x1x256xf32, #tpu.memory_space<vmem>>, vector<1x1x256xf32>
    %84 = vector.shape_cast %83 : vector<1x1x256xf32> to vector<1x256xf32>
    %85 = vector.broadcast %84 : vector<1x256xf32> to vector<8x256xf32>
    %86 = arith.mulf %60, %85 : vector<8x256xf32>
    %c255_i32_53 = arith.constant 255 : i32
    %87 = tpu.dynamic_rotate %60 by %c255_i32_53 dim 1 : vector<8x256xf32>, i32 -> vector<8x256xf32>
    %c5_54 = arith.constant 5 : index
    %c0_55 = arith.constant 0 : index
    %c0_56 = arith.constant 0 : index
    %88 = vector.load %arg4[%c5_54, %c0_55, %c0_56] : memref<9x1x256xf32, #tpu.memory_space<vmem>>, vector<1x1x256xf32>
    %89 = vector.shape_cast %88 : vector<1x1x256xf32> to vector<1x256xf32>
    %90 = vector.broadcast %89 : vector<1x256xf32> to vector<8x256xf32>
    %91 = arith.mulf %87, %90 : vector<8x256xf32>
    %c241_i32_57 = arith.constant 241 : i32
    %92 = tpu.dynamic_rotate %60 by %c241_i32_57 dim 1 : vector<8x256xf32>, i32 -> vector<8x256xf32>
    %c6_58 = arith.constant 6 : index
    %c0_59 = arith.constant 0 : index
    %c0_60 = arith.constant 0 : index
    %93 = vector.load %arg4[%c6_58, %c0_59, %c0_60] : memref<9x1x256xf32, #tpu.memory_space<vmem>>, vector<1x1x256xf32>
    %94 = vector.shape_cast %93 : vector<1x1x256xf32> to vector<1x256xf32>
    %95 = vector.broadcast %94 : vector<1x256xf32> to vector<8x256xf32>
    %96 = arith.mulf %92, %95 : vector<8x256xf32>
    %c240_i32_61 = arith.constant 240 : i32
    %97 = tpu.dynamic_rotate %60 by %c240_i32_61 dim 1 : vector<8x256xf32>, i32 -> vector<8x256xf32>
    %c7_62 = arith.constant 7 : index
    %c0_63 = arith.constant 0 : index
    %c0_64 = arith.constant 0 : index
    %98 = vector.load %arg4[%c7_62, %c0_63, %c0_64] : memref<9x1x256xf32, #tpu.memory_space<vmem>>, vector<1x1x256xf32>
    %99 = vector.shape_cast %98 : vector<1x1x256xf32> to vector<1x256xf32>
    %100 = vector.broadcast %99 : vector<1x256xf32> to vector<8x256xf32>
    %101 = arith.mulf %97, %100 : vector<8x256xf32>
    %c239_i32_65 = arith.constant 239 : i32
    %102 = tpu.dynamic_rotate %60 by %c239_i32_65 dim 1 : vector<8x256xf32>, i32 -> vector<8x256xf32>
    %c8_66 = arith.constant 8 : index
    %c0_67 = arith.constant 0 : index
    %c0_68 = arith.constant 0 : index
    %103 = vector.load %arg4[%c8_66, %c0_67, %c0_68] : memref<9x1x256xf32, #tpu.memory_space<vmem>>, vector<1x1x256xf32>
    %104 = vector.shape_cast %103 : vector<1x1x256xf32> to vector<1x256xf32>
    %105 = vector.broadcast %104 : vector<1x256xf32> to vector<8x256xf32>
    %106 = arith.mulf %102, %105 : vector<8x256xf32>
    %107 = tpu.concatenate %67, %72, %77, %82, %86, %91, %96, %101, %106 in 0 : vector<8x256xf32>, vector<8x256xf32>, vector<8x256xf32>, vector<8x256xf32>, vector<8x256xf32>, vector<8x256xf32>, vector<8x256xf32>, vector<8x256xf32>, vector<8x256xf32> -> vector<72x256xf32>
    %108 = arith.truncf %107 : vector<72x256xf32> to vector<72x256xbf16>
    %cst_69 = arith.constant dense<0.000000e+00> : vector<8x256xf32>
    %109 = tpu.matmul %62, %108, %cst_69 {dimension_numbers = #tpu.dot_dimension_numbers<[1], [0], [0], [1], [0, 0, 1, 1], [], []>} : vector<8x72xbf16>, vector<72x256xbf16>, vector<8x256xf32> -> vector<8x256xf32>
    %c0_70 = arith.constant 0 : index
    %c0_71 = arith.constant 0 : index
    %110 = vector.load %arg8[%c0_70, %c0_71] : memref<8x1xf32, #tpu.memory_space<vmem>>, vector<8x1xf32>
    %111 = vector.broadcast %110 : vector<8x1xf32> to vector<8x256xf32>
    %112 = arith.addf %109, %111 : vector<8x256xf32>
    %113 = arith.addf %112, %61 : vector<8x256xf32>
    %cst_72 = arith.constant 0.000000e+00 : f32
    %114 = vector.broadcast %cst_72 : f32 to vector<8x256xf32>
    %115 = arith.maximumf %113, %114 : vector<8x256xf32>
    %c0_73 = arith.constant 0 : index
    %c0_74 = arith.constant 0 : index
    %116 = vector.load %arg9[%c0_73, %c0_74] : memref<16x72xbf16, #tpu.memory_space<vmem>>, vector<16x72xbf16>
    %c17_i32_75 = arith.constant 17 : i32
    %117 = tpu.dynamic_rotate %115 by %c17_i32_75 dim 1 : vector<8x256xf32>, i32 -> vector<8x256xf32>
    %c0_76 = arith.constant 0 : index
    %c0_77 = arith.constant 0 : index
    %c0_78 = arith.constant 0 : index
    %118 = vector.load %arg4[%c0_76, %c0_77, %c0_78] : memref<9x1x256xf32, #tpu.memory_space<vmem>>, vector<1x1x256xf32>
    %119 = vector.shape_cast %118 : vector<1x1x256xf32> to vector<1x256xf32>
    %120 = vector.broadcast %119 : vector<1x256xf32> to vector<8x256xf32>
    %121 = arith.mulf %117, %120 : vector<8x256xf32>
    %c16_i32_79 = arith.constant 16 : i32
    %122 = tpu.dynamic_rotate %115 by %c16_i32_79 dim 1 : vector<8x256xf32>, i32 -> vector<8x256xf32>
    %c1_80 = arith.constant 1 : index
    %c0_81 = arith.constant 0 : index
    %c0_82 = arith.constant 0 : index
    %123 = vector.load %arg4[%c1_80, %c0_81, %c0_82] : memref<9x1x256xf32, #tpu.memory_space<vmem>>, vector<1x1x256xf32>
    %124 = vector.shape_cast %123 : vector<1x1x256xf32> to vector<1x256xf32>
    %125 = vector.broadcast %124 : vector<1x256xf32> to vector<8x256xf32>
    %126 = arith.mulf %122, %125 : vector<8x256xf32>
    %c15_i32_83 = arith.constant 15 : i32
    %127 = tpu.dynamic_rotate %115 by %c15_i32_83 dim 1 : vector<8x256xf32>, i32 -> vector<8x256xf32>
    %c2_84 = arith.constant 2 : index
    %c0_85 = arith.constant 0 : index
    %c0_86 = arith.constant 0 : index
    %128 = vector.load %arg4[%c2_84, %c0_85, %c0_86] : memref<9x1x256xf32, #tpu.memory_space<vmem>>, vector<1x1x256xf32>
    %129 = vector.shape_cast %128 : vector<1x1x256xf32> to vector<1x256xf32>
    %130 = vector.broadcast %129 : vector<1x256xf32> to vector<8x256xf32>
    %131 = arith.mulf %127, %130 : vector<8x256xf32>
    %c1_i32_87 = arith.constant 1 : i32
    %132 = tpu.dynamic_rotate %115 by %c1_i32_87 dim 1 : vector<8x256xf32>, i32 -> vector<8x256xf32>
    %c3_88 = arith.constant 3 : index
    %c0_89 = arith.constant 0 : index
    %c0_90 = arith.constant 0 : index
    %133 = vector.load %arg4[%c3_88, %c0_89, %c0_90] : memref<9x1x256xf32, #tpu.memory_space<vmem>>, vector<1x1x256xf32>
    %134 = vector.shape_cast %133 : vector<1x1x256xf32> to vector<1x256xf32>
    %135 = vector.broadcast %134 : vector<1x256xf32> to vector<8x256xf32>
    %136 = arith.mulf %132, %135 : vector<8x256xf32>
    %c4_91 = arith.constant 4 : index
    %c0_92 = arith.constant 0 : index
    %c0_93 = arith.constant 0 : index
    %137 = vector.load %arg4[%c4_91, %c0_92, %c0_93] : memref<9x1x256xf32, #tpu.memory_space<vmem>>, vector<1x1x256xf32>
    %138 = vector.shape_cast %137 : vector<1x1x256xf32> to vector<1x256xf32>
    %139 = vector.broadcast %138 : vector<1x256xf32> to vector<8x256xf32>
    %140 = arith.mulf %115, %139 : vector<8x256xf32>
    %c255_i32_94 = arith.constant 255 : i32
    %141 = tpu.dynamic_rotate %115 by %c255_i32_94 dim 1 : vector<8x256xf32>, i32 -> vector<8x256xf32>
    %c5_95 = arith.constant 5 : index
    %c0_96 = arith.constant 0 : index
    %c0_97 = arith.constant 0 : index
    %142 = vector.load %arg4[%c5_95, %c0_96, %c0_97] : memref<9x1x256xf32, #tpu.memory_space<vmem>>, vector<1x1x256xf32>
    %143 = vector.shape_cast %142 : vector<1x1x256xf32> to vector<1x256xf32>
    %144 = vector.broadcast %143 : vector<1x256xf32> to vector<8x256xf32>
    %145 = arith.mulf %141, %144 : vector<8x256xf32>
    %c241_i32_98 = arith.constant 241 : i32
    %146 = tpu.dynamic_rotate %115 by %c241_i32_98 dim 1 : vector<8x256xf32>, i32 -> vector<8x256xf32>
    %c6_99 = arith.constant 6 : index
    %c0_100 = arith.constant 0 : index
    %c0_101 = arith.constant 0 : index
    %147 = vector.load %arg4[%c6_99, %c0_100, %c0_101] : memref<9x1x256xf32, #tpu.memory_space<vmem>>, vector<1x1x256xf32>
    %148 = vector.shape_cast %147 : vector<1x1x256xf32> to vector<1x256xf32>
    %149 = vector.broadcast %148 : vector<1x256xf32> to vector<8x256xf32>
    %150 = arith.mulf %146, %149 : vector<8x256xf32>
    %c240_i32_102 = arith.constant 240 : i32
    %151 = tpu.dynamic_rotate %115 by %c240_i32_102 dim 1 : vector<8x256xf32>, i32 -> vector<8x256xf32>
    %c7_103 = arith.constant 7 : index
    %c0_104 = arith.constant 0 : index
    %c0_105 = arith.constant 0 : index
    %152 = vector.load %arg4[%c7_103, %c0_104, %c0_105] : memref<9x1x256xf32, #tpu.memory_space<vmem>>, vector<1x1x256xf32>
    %153 = vector.shape_cast %152 : vector<1x1x256xf32> to vector<1x256xf32>
    %154 = vector.broadcast %153 : vector<1x256xf32> to vector<8x256xf32>
    %155 = arith.mulf %151, %154 : vector<8x256xf32>
    %c239_i32_106 = arith.constant 239 : i32
    %156 = tpu.dynamic_rotate %115 by %c239_i32_106 dim 1 : vector<8x256xf32>, i32 -> vector<8x256xf32>
    %c8_107 = arith.constant 8 : index
    %c0_108 = arith.constant 0 : index
    %c0_109 = arith.constant 0 : index
    %157 = vector.load %arg4[%c8_107, %c0_108, %c0_109] : memref<9x1x256xf32, #tpu.memory_space<vmem>>, vector<1x1x256xf32>
    %158 = vector.shape_cast %157 : vector<1x1x256xf32> to vector<1x256xf32>
    %159 = vector.broadcast %158 : vector<1x256xf32> to vector<8x256xf32>
    %160 = arith.mulf %156, %159 : vector<8x256xf32>
    %161 = tpu.concatenate %121, %126, %131, %136, %140, %145, %150, %155, %160 in 0 : vector<8x256xf32>, vector<8x256xf32>, vector<8x256xf32>, vector<8x256xf32>, vector<8x256xf32>, vector<8x256xf32>, vector<8x256xf32>, vector<8x256xf32>, vector<8x256xf32> -> vector<72x256xf32>
    %162 = arith.truncf %161 : vector<72x256xf32> to vector<72x256xbf16>
    %cst_110 = arith.constant dense<0.000000e+00> : vector<16x256xf32>
    %163 = tpu.matmul %116, %162, %cst_110 {dimension_numbers = #tpu.dot_dimension_numbers<[1], [0], [0], [1], [0, 0, 1, 1], [], []>} : vector<16x72xbf16>, vector<72x256xbf16>, vector<16x256xf32> -> vector<16x256xf32>
    %c0_111 = arith.constant 0 : index
    %c0_112 = arith.constant 0 : index
    %164 = vector.load %arg10[%c0_111, %c0_112] : memref<16x1xf32, #tpu.memory_space<vmem>>, vector<16x1xf32>
    %165 = vector.broadcast %164 : vector<16x1xf32> to vector<16x256xf32>
    %166 = arith.addf %163, %165 : vector<16x256xf32>
    %167 = vector.extract_strided_slice %166 {offsets = [0, 0], sizes = [8, 256], strides = [1, 1]} : vector<16x256xf32> to vector<8x256xf32>
    %cst_113 = arith.constant 0.000000e+00 : f32
    %168 = vector.broadcast %cst_113 : f32 to vector<8x256xf32>
    %169 = arith.maximumf %167, %168 : vector<8x256xf32>
    %170 = vector.extract_strided_slice %166 {offsets = [8, 0], sizes = [8, 256], strides = [1, 1]} : vector<16x256xf32> to vector<8x256xf32>
    %c0_114 = arith.constant 0 : index
    %c0_115 = arith.constant 0 : index
    %171 = vector.load %arg11[%c0_114, %c0_115] : memref<8x72xbf16, #tpu.memory_space<vmem>>, vector<8x72xbf16>
    %c17_i32_116 = arith.constant 17 : i32
    %172 = tpu.dynamic_rotate %169 by %c17_i32_116 dim 1 : vector<8x256xf32>, i32 -> vector<8x256xf32>
    %c0_117 = arith.constant 0 : index
    %c0_118 = arith.constant 0 : index
    %c0_119 = arith.constant 0 : index
    %173 = vector.load %arg4[%c0_117, %c0_118, %c0_119] : memref<9x1x256xf32, #tpu.memory_space<vmem>>, vector<1x1x256xf32>
    %174 = vector.shape_cast %173 : vector<1x1x256xf32> to vector<1x256xf32>
    %175 = vector.broadcast %174 : vector<1x256xf32> to vector<8x256xf32>
    %176 = arith.mulf %172, %175 : vector<8x256xf32>
    %c16_i32_120 = arith.constant 16 : i32
    %177 = tpu.dynamic_rotate %169 by %c16_i32_120 dim 1 : vector<8x256xf32>, i32 -> vector<8x256xf32>
    %c1_121 = arith.constant 1 : index
    %c0_122 = arith.constant 0 : index
    %c0_123 = arith.constant 0 : index
    %178 = vector.load %arg4[%c1_121, %c0_122, %c0_123] : memref<9x1x256xf32, #tpu.memory_space<vmem>>, vector<1x1x256xf32>
    %179 = vector.shape_cast %178 : vector<1x1x256xf32> to vector<1x256xf32>
    %180 = vector.broadcast %179 : vector<1x256xf32> to vector<8x256xf32>
    %181 = arith.mulf %177, %180 : vector<8x256xf32>
    %c15_i32_124 = arith.constant 15 : i32
    %182 = tpu.dynamic_rotate %169 by %c15_i32_124 dim 1 : vector<8x256xf32>, i32 -> vector<8x256xf32>
    %c2_125 = arith.constant 2 : index
    %c0_126 = arith.constant 0 : index
    %c0_127 = arith.constant 0 : index
    %183 = vector.load %arg4[%c2_125, %c0_126, %c0_127] : memref<9x1x256xf32, #tpu.memory_space<vmem>>, vector<1x1x256xf32>
    %184 = vector.shape_cast %183 : vector<1x1x256xf32> to vector<1x256xf32>
    %185 = vector.broadcast %184 : vector<1x256xf32> to vector<8x256xf32>
    %186 = arith.mulf %182, %185 : vector<8x256xf32>
    %c1_i32_128 = arith.constant 1 : i32
    %187 = tpu.dynamic_rotate %169 by %c1_i32_128 dim 1 : vector<8x256xf32>, i32 -> vector<8x256xf32>
    %c3_129 = arith.constant 3 : index
    %c0_130 = arith.constant 0 : index
    %c0_131 = arith.constant 0 : index
    %188 = vector.load %arg4[%c3_129, %c0_130, %c0_131] : memref<9x1x256xf32, #tpu.memory_space<vmem>>, vector<1x1x256xf32>
    %189 = vector.shape_cast %188 : vector<1x1x256xf32> to vector<1x256xf32>
    %190 = vector.broadcast %189 : vector<1x256xf32> to vector<8x256xf32>
    %191 = arith.mulf %187, %190 : vector<8x256xf32>
    %c4_132 = arith.constant 4 : index
    %c0_133 = arith.constant 0 : index
    %c0_134 = arith.constant 0 : index
    %192 = vector.load %arg4[%c4_132, %c0_133, %c0_134] : memref<9x1x256xf32, #tpu.memory_space<vmem>>, vector<1x1x256xf32>
    %193 = vector.shape_cast %192 : vector<1x1x256xf32> to vector<1x256xf32>
    %194 = vector.broadcast %193 : vector<1x256xf32> to vector<8x256xf32>
    %195 = arith.mulf %169, %194 : vector<8x256xf32>
    %c255_i32_135 = arith.constant 255 : i32
    %196 = tpu.dynamic_rotate %169 by %c255_i32_135 dim 1 : vector<8x256xf32>, i32 -> vector<8x256xf32>
    %c5_136 = arith.constant 5 : index
    %c0_137 = arith.constant 0 : index
    %c0_138 = arith.constant 0 : index
    %197 = vector.load %arg4[%c5_136, %c0_137, %c0_138] : memref<9x1x256xf32, #tpu.memory_space<vmem>>, vector<1x1x256xf32>
    %198 = vector.shape_cast %197 : vector<1x1x256xf32> to vector<1x256xf32>
    %199 = vector.broadcast %198 : vector<1x256xf32> to vector<8x256xf32>
    %200 = arith.mulf %196, %199 : vector<8x256xf32>
    %c241_i32_139 = arith.constant 241 : i32
    %201 = tpu.dynamic_rotate %169 by %c241_i32_139 dim 1 : vector<8x256xf32>, i32 -> vector<8x256xf32>
    %c6_140 = arith.constant 6 : index
    %c0_141 = arith.constant 0 : index
    %c0_142 = arith.constant 0 : index
    %202 = vector.load %arg4[%c6_140, %c0_141, %c0_142] : memref<9x1x256xf32, #tpu.memory_space<vmem>>, vector<1x1x256xf32>
    %203 = vector.shape_cast %202 : vector<1x1x256xf32> to vector<1x256xf32>
    %204 = vector.broadcast %203 : vector<1x256xf32> to vector<8x256xf32>
    %205 = arith.mulf %201, %204 : vector<8x256xf32>
    %c240_i32_143 = arith.constant 240 : i32
    %206 = tpu.dynamic_rotate %169 by %c240_i32_143 dim 1 : vector<8x256xf32>, i32 -> vector<8x256xf32>
    %c7_144 = arith.constant 7 : index
    %c0_145 = arith.constant 0 : index
    %c0_146 = arith.constant 0 : index
    %207 = vector.load %arg4[%c7_144, %c0_145, %c0_146] : memref<9x1x256xf32, #tpu.memory_space<vmem>>, vector<1x1x256xf32>
    %208 = vector.shape_cast %207 : vector<1x1x256xf32> to vector<1x256xf32>
    %209 = vector.broadcast %208 : vector<1x256xf32> to vector<8x256xf32>
    %210 = arith.mulf %206, %209 : vector<8x256xf32>
    %c239_i32_147 = arith.constant 239 : i32
    %211 = tpu.dynamic_rotate %169 by %c239_i32_147 dim 1 : vector<8x256xf32>, i32 -> vector<8x256xf32>
    %c8_148 = arith.constant 8 : index
    %c0_149 = arith.constant 0 : index
    %c0_150 = arith.constant 0 : index
    %212 = vector.load %arg4[%c8_148, %c0_149, %c0_150] : memref<9x1x256xf32, #tpu.memory_space<vmem>>, vector<1x1x256xf32>
    %213 = vector.shape_cast %212 : vector<1x1x256xf32> to vector<1x256xf32>
    %214 = vector.broadcast %213 : vector<1x256xf32> to vector<8x256xf32>
    %215 = arith.mulf %211, %214 : vector<8x256xf32>
    %216 = tpu.concatenate %176, %181, %186, %191, %195, %200, %205, %210, %215 in 0 : vector<8x256xf32>, vector<8x256xf32>, vector<8x256xf32>, vector<8x256xf32>, vector<8x256xf32>, vector<8x256xf32>, vector<8x256xf32>, vector<8x256xf32>, vector<8x256xf32> -> vector<72x256xf32>
    %217 = arith.truncf %216 : vector<72x256xf32> to vector<72x256xbf16>
    %cst_151 = arith.constant dense<0.000000e+00> : vector<8x256xf32>
    %218 = tpu.matmul %171, %217, %cst_151 {dimension_numbers = #tpu.dot_dimension_numbers<[1], [0], [0], [1], [0, 0, 1, 1], [], []>} : vector<8x72xbf16>, vector<72x256xbf16>, vector<8x256xf32> -> vector<8x256xf32>
    %c0_152 = arith.constant 0 : index
    %c0_153 = arith.constant 0 : index
    %219 = vector.load %arg12[%c0_152, %c0_153] : memref<8x1xf32, #tpu.memory_space<vmem>>, vector<8x1xf32>
    %220 = vector.broadcast %219 : vector<8x1xf32> to vector<8x256xf32>
    %221 = arith.addf %218, %220 : vector<8x256xf32>
    %222 = arith.addf %221, %170 : vector<8x256xf32>
    %cst_154 = arith.constant 0.000000e+00 : f32
    %223 = vector.broadcast %cst_154 : f32 to vector<8x256xf32>
    %224 = arith.maximumf %222, %223 : vector<8x256xf32>
    %c0_155 = arith.constant 0 : index
    %c0_156 = arith.constant 0 : index
    %c0_157 = arith.constant 0 : index
    %225 = vector.load %arg13[%c0_155, %c0_156, %c0_157] : memref<1x8x256xf32, #tpu.memory_space<vmem>>, vector<1x8x256xf32>
    %226 = vector.shape_cast %225 : vector<1x8x256xf32> to vector<8x256xf32>
    %227 = vector.shape_cast %224 : vector<8x256xf32> to vector<1x8x256xf32>
    tpu.vector_store %arg13[%c0_155, %c0_156, %c0_157], %227 {strides = array<i32>} : memref<1x8x256xf32, #tpu.memory_space<vmem>>, vector<1x8x256xf32>,
    return
  }
  func.func @transform_0(%arg0: i32) -> (i32, i32, i32) {
    %c0_i32 = arith.constant 0 : i32
    %c0_i32_0 = arith.constant 0 : i32
    %c0_i32_1 = arith.constant 0 : i32
    return %arg0, %c0_i32, %c0_i32_0 : i32, i32, i32
  }
  func.func @transform_1(%arg0: i32) -> (i32, i32, i32) {
    %c0_i32 = arith.constant 0 : i32
    %c0_i32_0 = arith.constant 0 : i32
    %c0_i32_1 = arith.constant 0 : i32
    return %arg0, %c0_i32, %c0_i32_0 : i32, i32, i32
  }
  func.func @transform_2(%arg0: i32) -> (i32, i32) {
    %c0_i32 = arith.constant 0 : i32
    %c0_i32_0 = arith.constant 0 : i32
    %c0_i32_1 = arith.constant 0 : i32
    return %c0_i32, %c0_i32_0 : i32, i32
  }
  func.func @transform_3(%arg0: i32) -> (i32, i32, i32) {
    %c0_i32 = arith.constant 0 : i32
    %c0_i32_0 = arith.constant 0 : i32
    %c0_i32_1 = arith.constant 0 : i32
    %c0_i32_2 = arith.constant 0 : i32
    return %c0_i32, %c0_i32_0, %c0_i32_1 : i32, i32, i32
  }
  func.func @transform_4(%arg0: i32) -> (i32, i32) {
    %c0_i32 = arith.constant 0 : i32
    %c0_i32_0 = arith.constant 0 : i32
    %c0_i32_1 = arith.constant 0 : i32
    return %c0_i32, %c0_i32_0 : i32, i32
  }
  func.func @transform_5(%arg0: i32) -> (i32, i32) {
    %c0_i32 = arith.constant 0 : i32
    %c0_i32_0 = arith.constant 0 : i32
    %c0_i32_1 = arith.constant 0 : i32
    return %c0_i32, %c0_i32_0 : i32, i32
  }
  func.func @transform_6(%arg0: i32) -> (i32, i32) {
    %c0_i32 = arith.constant 0 : i32
    %c0_i32_0 = arith.constant 0 : i32
    %c0_i32_1 = arith.constant 0 : i32
    return %c0_i32, %c0_i32_0 : i32, i32
  }
  func.func @transform_7(%arg0: i32) -> (i32, i32) {
    %c0_i32 = arith.constant 0 : i32
    %c0_i32_0 = arith.constant 0 : i32
    %c0_i32_1 = arith.constant 0 : i32
    return %c0_i32, %c0_i32_0 : i32, i32
  }
  func.func @transform_8(%arg0: i32) -> (i32, i32) {
    %c0_i32 = arith.constant 0 : i32
    %c0_i32_0 = arith.constant 0 : i32
    %c0_i32_1 = arith.constant 0 : i32
    return %c0_i32, %c0_i32_0 : i32, i32
  }
  func.func @transform_9(%arg0: i32) -> (i32, i32) {
    %c0_i32 = arith.constant 0 : i32
    %c0_i32_0 = arith.constant 0 : i32
    %c0_i32_1 = arith.constant 0 : i32
    return %c0_i32, %c0_i32_0 : i32, i32
  }
  func.func @transform_10(%arg0: i32) -> (i32, i32) {
    %c0_i32 = arith.constant 0 : i32
    %c0_i32_0 = arith.constant 0 : i32
    %c0_i32_1 = arith.constant 0 : i32
    return %c0_i32, %c0_i32_0 : i32, i32
  }
  func.func @transform_11(%arg0: i32) -> (i32, i32) {
    %c0_i32 = arith.constant 0 : i32
    %c0_i32_0 = arith.constant 0 : i32
    %c0_i32_1 = arith.constant 0 : i32
    return %c0_i32, %c0_i32_0 : i32, i32
  }
  func.func @transform_12(%arg0: i32) -> (i32, i32, i32) {
    %c0_i32 = arith.constant 0 : i32
    %c0_i32_0 = arith.constant 0 : i32
    %c0_i32_1 = arith.constant 0 : i32
    return %arg0, %c0_i32, %c0_i32_0 : i32, i32, i32
  }
}

</mosaic_0001>

<llo_original>
// kernel: decoder_block.1
$region0: #{decoder_block.1}
  #allocation0 [shape = 'u32[]', space=smem, size = 0x4, offset = 0x4, fixed_abs, tag = 'smem constant byte address 0x4 - core index']
  #allocation1 [shape = 'u32[72,128]{1,0:T(1,128)}', space=vmem, size = 0x9000, scoped, tag = 'internal scratch']
  %s0 = inlined_call_operand.vmem [shape: f32[2,8,64], index: 0, kind: input, shape index: {}]
  %s1 = inlined_call_operand.vmem [shape: f32[2,8,256], index: 1, kind: input, shape index: {}]
  %s2 = inlined_call_operand.vmem [shape: f32[64,256], index: 2, kind: input, shape index: {}]
  %s3 = inlined_call_operand.vmem [shape: f32[9,1,256], index: 3, kind: input, shape index: {}]
  %s4 = inlined_call_operand.vmem [shape: bf16[16,144], index: 4, kind: input, shape index: {}]
  %s5 = inlined_call_operand.vmem [shape: f32[16,1], index: 5, kind: input, shape index: {}]
  %s6 = inlined_call_operand.vmem [shape: bf16[8,72], index: 6, kind: input, shape index: {}]
  %s7 = inlined_call_operand.vmem [shape: f32[8,1], index: 7, kind: input, shape index: {}]
  %s8 = inlined_call_operand.vmem [shape: bf16[16,72], index: 8, kind: input, shape index: {}]
  %s9 = inlined_call_operand.vmem [shape: f32[16,1], index: 9, kind: input, shape index: {}]
  %s10 = inlined_call_operand.vmem [shape: bf16[8,72], index: 10, kind: input, shape index: {}]
  %s11 = inlined_call_operand.vmem [shape: f32[8,1], index: 11, kind: input, shape index: {}]
  %s12 = inlined_call_operand.vmem [shape: f32[2,8,256], index: 12, kind: output, shape index: {}]
  %s13 = sld [smem:[#allocation0]]
  $region81: #{decoder_block.1} parent=0
    _
  %s15 = ssub.s32 1, %s13
  %s16 = scalar_select 0, %s15, %s13
  loop: start=0, step=1, limit=4
  $region2: #{decoder_block.1} parent=0 // loop_pre_header
    _
  $region3: #{decoder_block.1} parent=0 // loop_header
    %s18 = sphi 0, %s22
    %p19 = scmp.ge.s32.totalorder %s18, 4
    %s28 = sphi 0, %s30
    %s31 = sphi 0, %s28
    %s32 = sphi 0, %s31
    %s48 = sphi 0, %s32
    %s54 = sphi 0, %s56
    %s57 = sphi 0, %s54
    %s58 = sphi 0, %s57
    %s74 = sphi 0, %s58
    %s78 = sphi 0, %s78
    %s80 = sphi 0, %s78
    %s81 = sphi 0, %s80
    %s95 = sphi 0, %s81
    %s99 = sphi 0, %s99
    %s101 = sphi 0, %s99
    %s102 = sphi 0, %s101
    %s116 = sphi 0, %s102
    %s120 = sphi 0, %s120
    %s122 = sphi 0, %s120
    %s123 = sphi 0, %s122
    %s137 = sphi 0, %s123
    %s141 = sphi 0, %s141
    %s143 = sphi 0, %s141
    %s144 = sphi 0, %s143
    %s158 = sphi 0, %s144
    %s162 = sphi 0, %s162
    %s164 = sphi 0, %s162
    %s165 = sphi 0, %s164
    %s179 = sphi 0, %s165
    %s183 = sphi 0, %s183
    %s185 = sphi 0, %s183
    %s186 = sphi 0, %s185
    %s200 = sphi 0, %s186
    %s204 = sphi 0, %s204
    %s206 = sphi 0, %s204
    %s207 = sphi 0, %s206
    %s221 = sphi 0, %s207
    %s225 = sphi 0, %s225
    %s227 = sphi 0, %s225
    %s228 = sphi 0, %s227
    %s242 = sphi 0, %s228
    %s246 = sphi 0, %s246
    %s248 = sphi 0, %s246
    %s249 = sphi 0, %s248
    %s263 = sphi 0, %s249
    %s267 = sphi 0, %s267
    %s269 = sphi 0, %s267
    %s270 = sphi 0, %s269
    %s284 = sphi 0, %s270
    %s290 = sphi 0, %s292
    %s293 = sphi 0, %s290
    %s294 = sphi 0, %s293
    %s310 = sphi 0, %s294
  $region4: #{decoder_block.1} parent=0 // loop_header_branch
    %21 = sbr.rel (%p19) target = $region8
  $region5: #{decoder_block.1} parent=0 // loop_body
    %s23 = ssub.s32 %s18, 1
    %s24 = ssub.s32 %s18, 2
    %s25 = sadd.s32 %s18, 1
    %s26 = ssub.s32 %s18, %s25
    %p27 = scmp.eq.s32.totalorder %s26, 0
    %s29 = sadd.s32 %s28, 1
    %s30 = scalar_select %p27, %s28, %s29
    %p33 = pneg %p27
    %p34 = scmp.eq.s32.totalorder %s18, 1
    %p35 = por %p33, %p34
    %p36 = scmp.ne.s32.totalorder %s28, %s31
    %p37 = scmp.eq.s32.totalorder %s18, 0
    %p38 = por %p36, %p37
    %p39 = scmp.ne.s32.totalorder %s28, %s31
    %p40 = scmp.eq.s32.totalorder %s23, 1
    %p41 = por %p39, %p40
    %p42 = scmp.ne.s32.totalorder %s31, %s32
    %p43 = scmp.eq.s32.totalorder %s23, 0
    %p44 = por %p42, %p43
    %p45 = scmp.ne.s32.totalorder %s31, %s32
    %p46 = scmp.eq.s32.totalorder %s24, 1
    %p47 = por %p45, %p46
    %p49 = scmp.ne.s32.totalorder %s32, %s48
    %p50 = scmp.eq.s32.totalorder %s24, 0
    %p51 = por %p49, %p50
    %s52 = ssub.s32 %s18, %s25
    %p53 = scmp.eq.s32.totalorder %s52, 0
    %s55 = sadd.s32 %s54, 1
    %s56 = scalar_select %p53, %s54, %s55
    %p59 = pneg %p53
    %p60 = scmp.eq.s32.totalorder %s18, 1
    %p61 = por %p59, %p60
    %p62 = scmp.ne.s32.totalorder %s54, %s57
    %p63 = scmp.eq.s32.totalorder %s18, 0
    %p64 = por %p62, %p63
    %p65 = scmp.ne.s32.totalorder %s54, %s57
    %p66 = scmp.eq.s32.totalorder %s23, 1
    %p67 = por %p65, %p66
    %p68 = scmp.ne.s32.totalorder %s57, %s58
    %p69 = scmp.eq.s32.totalorder %s23, 0
    %p70 = por %p68, %p69
    %p71 = scmp.ne.s32.totalorder %s57, %s58
    %p72 = scmp.eq.s32.totalorder %s24, 1
    %p73 = por %p71, %p72
    %p75 = scmp.ne.s32.totalorder %s58, %s74
    %p76 = scmp.eq.s32.totalorder %s24, 0
    %p77 = por %p75, %p76
    %s79 = sadd.s32 %s78, 1
    %p82 = scmp.eq.s32.totalorder %s18, 1
    %p83 = scmp.ne.s32.totalorder %s78, %s80
    %p84 = scmp.eq.s32.totalorder %s18, 0
    %p85 = por %p83, %p84
    %p86 = scmp.ne.s32.totalorder %s78, %s80
    %p87 = scmp.eq.s32.totalorder %s23, 1
    %p88 = por %p86, %p87
    %p89 = scmp.ne.s32.totalorder %s80, %s81
    %p90 = scmp.eq.s32.totalorder %s23, 0
    %p91 = por %p89, %p90
    %p92 = scmp.ne.s32.totalorder %s80, %s81
    %p93 = scmp.eq.s32.totalorder %s24, 1
    %p94 = por %p92, %p93
    %p96 = scmp.ne.s32.totalorder %s81, %s95
    %p97 = scmp.eq.s32.totalorder %s24, 0
    %p98 = por %p96, %p97
    %s100 = sadd.s32 %s99, 1
    %p103 = scmp.eq.s32.totalorder %s18, 1
    %p104 = scmp.ne.s32.totalorder %s99, %s101
    %p105 = scmp.eq.s32.totalorder %s18, 0
    %p106 = por %p104, %p105
    %p107 = scmp.ne.s32.totalorder %s99, %s101
    %p108 = scmp.eq.s32.totalorder %s23, 1
    %p109 = por %p107, %p108
    %p110 = scmp.ne.s32.totalorder %s101, %s102
    %p111 = scmp.eq.s32.totalorder %s23, 0
    %p112 = por %p110, %p111
    %p113 = scmp.ne.s32.totalorder %s101, %s102
    %p114 = scmp.eq.s32.totalorder %s24, 1
    %p115 = por %p113, %p114
    %p117 = scmp.ne.s32.totalorder %s102, %s116
    %p118 = scmp.eq.s32.totalorder %s24, 0
    %p119 = por %p117, %p118
    %s121 = sadd.s32 %s120, 1
    %p124 = scmp.eq.s32.totalorder %s18, 1
    %p125 = scmp.ne.s32.totalorder %s120, %s122
    %p126 = scmp.eq.s32.totalorder %s18, 0
    %p127 = por %p125, %p126
    %p128 = scmp.ne.s32.totalorder %s120, %s122
    %p129 = scmp.eq.s32.totalorder %s23, 1
    %p130 = por %p128, %p129
    %p131 = scmp.ne.s32.totalorder %s122, %s123
    %p132 = scmp.eq.s32.totalorder %s23, 0
    %p133 = por %p131, %p132
    %p134 = scmp.ne.s32.totalorder %s122, %s123
    %p135 = scmp.eq.s32.totalorder %s24, 1
    %p136 = por %p134, %p135
    %p138 = scmp.ne.s32.totalorder %s123, %s137
    %p139 = scmp.eq.s32.totalorder %s24, 0
    %p140 = por %p138, %p139
    %s142 = sadd.s32 %s141, 1
    %p145 = scmp.eq.s32.totalorder %s18, 1
    %p146 = scmp.ne.s32.totalorder %s141, %s143
    %p147 = scmp.eq.s32.totalorder %s18, 0
    %p148 = por %p146, %p147
    %p149 = scmp.ne.s32.totalorder %s141, %s143
    %p150 = scmp.eq.s32.totalorder %s23, 1
    %p151 = por %p149, %p150
    %p152 = scmp.ne.s32.totalorder %s143, %s144
    %p153 = scmp.eq.s32.totalorder %s23, 0
    %p154 = por %p152, %p153
    %p155 = scmp.ne.s32.totalorder %s143, %s144
    %p156 = scmp.eq.s32.totalorder %s24, 1
    %p157 = por %p155, %p156
    %p159 = scmp.ne.s32.totalorder %s144, %s158
    %p160 = scmp.eq.s32.totalorder %s24, 0
    %p161 = por %p159, %p160
    %s163 = sadd.s32 %s162, 1
    %p166 = scmp.eq.s32.totalorder %s18, 1
    %p167 = scmp.ne.s32.totalorder %s162, %s164
    %p168 = scmp.eq.s32.totalorder %s18, 0
    %p169 = por %p167, %p168
    %p170 = scmp.ne.s32.totalorder %s162, %s164
    %p171 = scmp.eq.s32.totalorder %s23, 1
    %p172 = por %p170, %p171
    %p173 = scmp.ne.s32.totalorder %s164, %s165
    %p174 = scmp.eq.s32.totalorder %s23, 0
    %p175 = por %p173, %p174
    %p176 = scmp.ne.s32.totalorder %s164, %s165
    %p177 = scmp.eq.s32.totalorder %s24, 1
    %p178 = por %p176, %p177
    %p180 = scmp.ne.s32.totalorder %s165, %s179
    %p181 = scmp.eq.s32.totalorder %s24, 0
    %p182 = por %p180, %p181
    %s184 = sadd.s32 %s183, 1
    %p187 = scmp.eq.s32.totalorder %s18, 1
    %p188 = scmp.ne.s32.totalorder %s183, %s185
    %p189 = scmp.eq.s32.totalorder %s18, 0
    %p190 = por %p188, %p189
    %p191 = scmp.ne.s32.totalorder %s183, %s185
    %p192 = scmp.eq.s32.totalorder %s23, 1
    %p193 = por %p191, %p192
    %p194 = scmp.ne.s32.totalorder %s185, %s186
    %p195 = scmp.eq.s32.totalorder %s23, 0
    %p196 = por %p194, %p195
    %p197 = scmp.ne.s32.totalorder %s185, %s186
    %p198 = scmp.eq.s32.totalorder %s24, 1
    %p199 = por %p197, %p198
    %p201 = scmp.ne.s32.totalorder %s186, %s200
    %p202 = scmp.eq.s32.totalorder %s24, 0
    %p203 = por %p201, %p202
    %s205 = sadd.s32 %s204, 1
    %p208 = scmp.eq.s32.totalorder %s18, 1
    %p209 = scmp.ne.s32.totalorder %s204, %s206
    %p210 = scmp.eq.s32.totalorder %s18, 0
    %p211 = por %p209, %p210
    %p212 = scmp.ne.s32.totalorder %s204, %s206
    %p213 = scmp.eq.s32.totalorder %s23, 1
    %p214 = por %p212, %p213
    %p215 = scmp.ne.s32.totalorder %s206, %s207
    %p216 = scmp.eq.s32.totalorder %s23, 0
    %p217 = por %p215, %p216
    %p218 = scmp.ne.s32.totalorder %s206, %s207
    %p219 = scmp.eq.s32.totalorder %s24, 1
    %p220 = por %p218, %p219
    %p222 = scmp.ne.s32.totalorder %s207, %s221
    %p223 = scmp.eq.s32.totalorder %s24, 0
    %p224 = por %p222, %p223
    %s226 = sadd.s32 %s225, 1
    %p229 = scmp.eq.s32.totalorder %s18, 1
    %p230 = scmp.ne.s32.totalorder %s225, %s227
    %p231 = scmp.eq.s32.totalorder %s18, 0
    %p232 = por %p230, %p231
    %p233 = scmp.ne.s32.totalorder %s225, %s227
    %p234 = scmp.eq.s32.totalorder %s23, 1
    %p235 = por %p233, %p234
    %p236 = scmp.ne.s32.totalorder %s227, %s228
    %p237 = scmp.eq.s32.totalorder %s23, 0
    %p238 = por %p236, %p237
    %p239 = scmp.ne.s32.totalorder %s227, %s228
    %p240 = scmp.eq.s32.totalorder %s24, 1
    %p241 = por %p239, %p240
    %p243 = scmp.ne.s32.totalorder %s228, %s242
    %p244 = scmp.eq.s32.totalorder %s24, 0
    %p245 = por %p243, %p244
    %s247 = sadd.s32 %s246, 1
    %p250 = scmp.eq.s32.totalorder %s18, 1
    %p251 = scmp.ne.s32.totalorder %s246, %s248
    %p252 = scmp.eq.s32.totalorder %s18, 0
    %p253 = por %p251, %p252
    %p254 = scmp.ne.s32.totalorder %s246, %s248
    %p255 = scmp.eq.s32.totalorder %s23, 1
    %p256 = por %p254, %p255
    %p257 = scmp.ne.s32.totalorder %s248, %s249
    %p258 = scmp.eq.s32.totalorder %s23, 0
    %p259 = por %p257, %p258
    %p260 = scmp.ne.s32.totalorder %s248, %s249
    %p261 = scmp.eq.s32.totalorder %s24, 1
    %p262 = por %p260, %p261
    %p264 = scmp.ne.s32.totalorder %s249, %s263
    %p265 = scmp.eq.s32.totalorder %s24, 0
    %p266 = por %p264, %p265
    %s268 = sadd.s32 %s267, 1
    %p271 = scmp.eq.s32.totalorder %s18, 1
    %p272 = scmp.ne.s32.totalorder %s267, %s269
    %p273 = scmp.eq.s32.totalorder %s18, 0
    %p274 = por %p272, %p273
    %p275 = scmp.ne.s32.totalorder %s267, %s269
    %p276 = scmp.eq.s32.totalorder %s23, 1
    %p277 = por %p275, %p276
    %p278 = scmp.ne.s32.totalorder %s269, %s270
    %p279 = scmp.eq.s32.totalorder %s23, 0
    %p280 = por %p278, %p279
    %p281 = scmp.ne.s32.totalorder %s269, %s270
    %p282 = scmp.eq.s32.totalorder %s24, 1
    %p283 = por %p281, %p282
    %p285 = scmp.ne.s32.totalorder %s270, %s284
    %p286 = scmp.eq.s32.totalorder %s24, 0
    %p287 = por %p285, %p286
    %s288 = ssub.s32 %s18, %s25
    %p289 = scmp.eq.s32.totalorder %s288, 0
    %s291 = sadd.s32 %s290, 1
    %s292 = scalar_select %p289, %s290, %s291
    %p295 = pneg %p289
    %p296 = scmp.eq.s32.totalorder %s18, 1
    %p297 = por %p295, %p296
    %p298 = scmp.ne.s32.totalorder %s290, %s293
    %p299 = scmp.eq.s32.totalorder %s18, 0
    %p300 = por %p298, %p299
    %p301 = scmp.ne.s32.totalorder %s290, %s293
    %p302 = scmp.eq.s32.totalorder %s23, 1
    %p303 = por %p301, %p302
    %p304 = scmp.ne.s32.totalorder %s293, %s294
    %p305 = scmp.eq.s32.totalorder %s23, 0
    %p306 = por %p304, %p305
    %p307 = scmp.ne.s32.totalorder %s293, %s294
    %p308 = scmp.eq.s32.totalorder %s24, 1
    %p309 = por %p307, %p308
    %p311 = scmp.ne.s32.totalorder %s294, %s310
    %p312 = scmp.eq.s32.totalorder %s24, 0
    %p313 = por %p311, %p312
    %p314 = scmp.le.s32.totalorder 1, %s18
    %p315 = scmp.lt.s32.totalorder %s18, 3
    %p316 = pnand %p314, %p315
    %p317 = pneg %p316
    // Predicated region
    $region9: #{decoder_block.1} parent=5 // pred_check
      _
    $region10: #{decoder_block.1} parent=5 // pred_check_branch
      %319 = sbr.rel (%p316) target = $region12
    $region11: #{decoder_block.1} parent=5 // pred_region
      %s320 = ssub.s32 %s18, 1
      // Predicated region
      $region13: #{decoder_block.1} parent=11 // pred_check
        %p321 = pneg %p91
      $region14: #{decoder_block.1} parent=11 // pred_check_branch
        %323 = sbr.rel (%p321) target = $region16
      $region15: #{decoder_block.1} parent=11 // pred_region
        _
      $region16: #{decoder_block.1} parent=11 // pred_fallthru
        _
      // Predicated region
      $region17: #{decoder_block.1} parent=11 // pred_check
        %p324 = pneg %p112
      $region18: #{decoder_block.1} parent=11 // pred_check_branch
        %326 = sbr.rel (%p324) target = $region20
      $region19: #{decoder_block.1} parent=11 // pred_region
        _
      $region20: #{decoder_block.1} parent=11 // pred_fallthru
        _
      // Predicated region
      $region21: #{decoder_block.1} parent=11 // pred_check
        %p327 = pneg %p133
      $region22: #{decoder_block.1} parent=11 // pred_check_branch
        %329 = sbr.rel (%p327) target = $region24
      $region23: #{decoder_block.1} parent=11 // pred_region
        _
      $region24: #{decoder_block.1} parent=11 // pred_fallthru
        _
      // Predicated region
      $region25: #{decoder_block.1} parent=11 // pred_check
        %p330 = pneg %p154
      $region26: #{decoder_block.1} parent=11 // pred_check_branch
        %332 = sbr.rel (%p330) target = $region28
      $region27: #{decoder_block.1} parent=11 // pred_region
        _
      $region28: #{decoder_block.1} parent=11 // pred_fallthru
        _
      // Predicated region
      $region29: #{decoder_block.1} parent=11 // pred_check
        %p333 = pneg %p175
      $region30: #{decoder_block.1} parent=11 // pred_check_branch
        %335 = sbr.rel (%p333) target = $region32
      $region31: #{decoder_block.1} parent=11 // pred_region
        _
      $region32: #{decoder_block.1} parent=11 // pred_fallthru
        _
      // Predicated region
      $region33: #{decoder_block.1} parent=11 // pred_check
        %p336 = pneg %p196
      $region34: #{decoder_block.1} parent=11 // pred_check_branch
        %338 = sbr.rel (%p336) target = $region36
      $region35: #{decoder_block.1} parent=11 // pred_region
        _
      $region36: #{decoder_block.1} parent=11 // pred_fallthru
        _
      // Predicated region
      $region37: #{decoder_block.1} parent=11 // pred_check
        %p339 = pneg %p217
      $region38: #{decoder_block.1} parent=11 // pred_check_branch
        %341 = sbr.rel (%p339) target = $region40
      $region39: #{decoder_block.1} parent=11 // pred_region
        _
      $region40: #{decoder_block.1} parent=11 // pred_fallthru
        _
      // Predicated region
      $region41: #{decoder_block.1} parent=11 // pred_check
        %p342 = pneg %p238
      $region42: #{decoder_block.1} parent=11 // pred_check_branch
        %344 = sbr.rel (%p342) target = $region44
      $region43: #{decoder_block.1} parent=11 // pred_region
        _
      $region44: #{decoder_block.1} parent=11 // pred_fallthru
        _
      // Predicated region
      $region45: #{decoder_block.1} parent=11 // pred_check
        %p345 = pneg %p259
      $region46: #{decoder_block.1} parent=11 // pred_check_branch
        %347 = sbr.rel (%p345) target = $region48
      $region47: #{decoder_block.1} parent=11 // pred_region
        _
      $region48: #{decoder_block.1} parent=11 // pred_fallthru
        _
      // Predicated region
      $region49: #{decoder_block.1} parent=11 // pred_check
        %p348 = pneg %p280
      $region50: #{decoder_block.1} parent=11 // pred_check_branch
        %350 = sbr.rel (%p348) target = $region52
      $region51: #{decoder_block.1} parent=11 // pred_region
        _
      $region52: #{decoder_block.1} parent=11 // pred_fallthru
        _
    $region12: #{decoder_block.1} parent=5 // pred_fallthru
      _
    %p351 = scmp.lt.s32.totalorder %s18, 2
    // Predicated region
    $region53: #{decoder_block.1} parent=5 // pred_check
      %p352 = pneg %p351
    $region54: #{decoder_block.1} parent=5 // pred_check_branch
      %354 = sbr.rel (%p352) target = $region56
    $region55: #{decoder_block.1} parent=5 // pred_region
      // Predicated region
      $region57: #{decoder_block.1} parent=55 // pred_check
        %p355 = pneg %p38
      $region58: #{decoder_block.1} parent=55 // pred_check_branch
        %357 = sbr.rel (%p355) target = $region60
      $region59: #{decoder_block.1} parent=55 // pred_region
        %p358 = scmp.lt.s32.totalorder %s18, 1
        %s359 = scalar_select %p358, %s18, 1
        %s360 = smul.addr %s359, 8
        %s361 = scalar_lea.vmem %s0, %s360
      $region60: #{decoder_block.1} parent=55 // pred_fallthru
        _
      // Predicated region
      $region61: #{decoder_block.1} parent=55 // pred_check
        %p362 = pneg %p64
      $region62: #{decoder_block.1} parent=55 // pred_check_branch
        %364 = sbr.rel (%p362) target = $region64
      $region63: #{decoder_block.1} parent=55 // pred_region
        %p365 = scmp.lt.s32.totalorder %s18, 1
        %s366 = scalar_select %p365, %s18, 1
        %s367 = smul.addr %s366, 2
        %s368 = smul.addr %s367, 8
        %s369 = scalar_lea.vmem %s1, %s368
      $region64: #{decoder_block.1} parent=55 // pred_fallthru
        _
    $region56: #{decoder_block.1} parent=5 // pred_fallthru
      _
    %p370 = scmp.le.s32.totalorder 1, %s18
    %p371 = scmp.lt.s32.totalorder %s18, 3
    %p372 = pnand %p370, %p371
    %p373 = pneg %p372
    // Predicated region
    $region65: #{decoder_block.1} parent=5 // pred_check
      _
    $region66: #{decoder_block.1} parent=5 // pred_check_branch
      %375 = sbr.rel (%p372) target = $region68
    $region67: #{decoder_block.1} parent=5 // pred_region
      %s376 = ssub.s32 %s18, 1
      %p377 = scmp.lt.s32.totalorder %s23, 1
      %s378 = scalar_select %p377, %s23, 1
      %s379 = smul.addr %s378, 8
      %s380 = scalar_lea.vmem %s0, %s379
      %p381 = pneg %p44
      %p382 = pneg %p41
      %p383 = scmp.lt.s32.totalorder %s23, 1
      %s384 = scalar_select %p383, %s23, 1
      %s385 = smul.addr %s384, 2
      %s386 = smul.addr %s385, 8
      %s387 = scalar_lea.vmem %s1, %s386
      %p388 = pneg %p70
      %p389 = pneg %p67
      %p390 = pneg %p91
      %p391 = pneg %p88
      %p392 = pneg %p112
      %p393 = pneg %p109
      %p394 = pneg %p133
      %p395 = pneg %p130
      %p396 = pneg %p154
      %p397 = pneg %p151
      %p398 = pneg %p175
      %p399 = pneg %p172
      %p400 = pneg %p196
      %p401 = pneg %p193
      %p402 = pneg %p217
      %p403 = pneg %p214
      %p404 = pneg %p238
      %p405 = pneg %p235
      %p406 = pneg %p259
      %p407 = pneg %p256
      %p408 = pneg %p280
      %p409 = pneg %p277
      %p410 = pneg %p306
      %p411 = pneg %p303
      %p412 = scmp.lt.s32.totalorder %s23, 1
      %s413 = scalar_select %p412, %s23, 1
      %s414 = smul.addr %s413, 2
      %s415 = smul.addr %s414, 8
      %s416 = scalar_lea.vmem %s12, %s415
      %p417 = scmp.lt.s32.totalorder %s23, 1
      %s418 = scalar_select %p417, %s23, 1
      %s419 = smul.addr %s418, 8
      %s420 = scalar_lea.vmem %s0, %s419
      %p421 = scmp.lt.s32.totalorder %s23, 1
      %s422 = scalar_select %p421, %s23, 1
      %s423 = smul.addr %s422, 2
      %s424 = smul.addr %s423, 8
      %s425 = scalar_lea.vmem %s1, %s424
      %p426 = scmp.lt.s32.totalorder %s23, 1
      %s427 = scalar_select %p426, %s23, 1
      %s428 = smul.addr %s427, 2
      %s429 = smul.addr %s428, 8
      %s430 = scalar_lea.vmem %s12, %s429
      %v432 = vld [vmem:[%s420] sm:$0xff]
      %v433 = vld [vmem:[%s2] sm:$0xff]
      %v434 = vld [vmem:[%s2 + $0x8] sm:$0xff]
      %v435 = vld [vmem:[%s2 + $0x10] sm:$0xff]
      %v436 = vld [vmem:[%s2 + $0x18] sm:$0xff]
      %v437 = vld [vmem:[%s2 + $0x20] sm:$0xff]
      %v438 = vld [vmem:[%s2 + $0x28] sm:$0xff]
      %v439 = vld [vmem:[%s2 + $0x30] sm:$0xff]
      %v440 = vld [vmem:[%s2 + $0x38] sm:$0xff]
      %v441 = vld [vmem:[%s2 + $0x40] sm:$0xff]
      %v442 = vld [vmem:[%s2 + $0x48] sm:$0xff]
      %v443 = vld [vmem:[%s2 + $0x50] sm:$0xff]
      %v444 = vld [vmem:[%s2 + $0x58] sm:$0xff]
      %v445 = vld [vmem:[%s2 + $0x60] sm:$0xff]
      %v446 = vld [vmem:[%s2 + $0x68] sm:$0xff]
      %v447 = vld [vmem:[%s2 + $0x70] sm:$0xff]
      %v448 = vld [vmem:[%s2 + $0x78] sm:$0xff]
      %vm449 = vcmask 523264
      %v451 = vsel %vm449, %v432, 0
      %453 = vmatpush.msra.mxu0 0.0
      %454 = vmatpush.msra.mxu0 0.0
      %455 = vmatpush.msra.mxu0 0.0
      %456 = vmatpush.msra.mxu0 0.0
      %457 = vmatpush.msra.mxu0 0.0
      %458 = vmatpush.msra.mxu0 0.0
      %459 = vmatpush.msra.mxu0 0.0
      %460 = vmatpush.msra.mxu0 0.0
      %461 = vmatpush.msra.mxu0 %v447
      %462 = vmatpush.msra.mxu0 %v445
      %463 = vmatpush.msra.mxu0 %v443
      %464 = vmatpush.msra.mxu0 %v441
      %465 = vmatpush.msra.mxu0 %v439
      %466 = vmatpush.msra.mxu0 %v437
      %467 = vmatpush.msra.mxu0 %v435
      %468 = vmatpush.msra.mxu0 %v433
      %469 = vmatmul.f32.gmra.mxu0 %v451
      %v470 = vpop.f32.mrf.mxu0
      %v471 = vadd.f32 0.0, %v470
      %472 = vdwg.mxu0
      %473 = vmatpush.msra.mxu0 0.0
      %474 = vmatpush.msra.mxu0 0.0
      %475 = vmatpush.msra.mxu0 0.0
      %476 = vmatpush.msra.mxu0 0.0
      %477 = vmatpush.msra.mxu0 0.0
      %478 = vmatpush.msra.mxu0 0.0
      %479 = vmatpush.msra.mxu0 0.0
      %480 = vmatpush.msra.mxu0 0.0
      %481 = vmatpush.msra.mxu0 %v448
      %482 = vmatpush.msra.mxu0 %v446
      %483 = vmatpush.msra.mxu0 %v444
      %484 = vmatpush.msra.mxu0 %v442
      %485 = vmatpush.msra.mxu0 %v440
      %486 = vmatpush.msra.mxu0 %v438
      %487 = vmatpush.msra.mxu0 %v436
      %488 = vmatpush.msra.mxu0 %v434
      %489 = vmatmul.f32.gmra.mxu0 %v451
      %v490 = vpop.f32.mrf.mxu0
      %v491 = vadd.f32 0.0, %v490
      %492 = vdwg.mxu0
      %v493 = vld [vmem:[%s425] sm:$0xff]
      %v494 = vld [vmem:[%s425 + $0x8] sm:$0xff]
      %v495 = vld [vmem:[%s4] sm:$0xff]
      %v496 = vld [vmem:[%s4 + $0x8] sm:$0xff]
      %497 = vrot.lane.b32.xlu0 %v471, 17
      %v498 = vpop.permute.xlu0 %497
      %499 = vrot.lane.b32.xlu0 %v493, 17
      %v500 = vpop.permute.xlu0 %499
      %501 = vrot.lane.b32.xlu0 %v491, 17
      %v502 = vpop.permute.xlu0 %501
      %503 = vrot.lane.b32.xlu0 %v494, 17
      %v504 = vpop.permute.xlu0 %503
      %v505 = vlaneseq
      %v506 = vand.u32 %v505, 127
      %vm507 = vcmp.lt.s32.totalorder %v506, 17
      %v508 = vsel %vm507, %v498, %v502
      %v509 = vsel %vm507, %v500, %v504
      %v510 = vsel %vm507, %v502, %v498
      %v511 = vsel %vm507, %v504, %v500
      %v512 = vld [vmem:[%s3] sm:$0x3]
      %v514 = vperm.slane %v512, 0
      %v515 = vperm.slane %v512, 1
      %v518 = vmul.f32 %v510, %v514
      %v519 = vmul.f32 %v508, %v515
      %v520 = vmul.f32 %v511, %v514
      %v521 = vmul.f32 %v509, %v515
      %522 = vrot.lane.b32.xlu0 %v471, 16
      %v523 = vpop.permute.xlu0 %522
      %524 = vrot.lane.b32.xlu0 %v493, 16
      %v525 = vpop.permute.xlu0 %524
      %526 = vrot.lane.b32.xlu0 %v491, 16
      %v527 = vpop.permute.xlu0 %526
      %528 = vrot.lane.b32.xlu0 %v494, 16
      %v529 = vpop.permute.xlu0 %528
      %vm530 = vcmp.lt.s32.totalorder %v506, 16
      %v531 = vsel %vm530, %v523, %v527
      %v532 = vsel %vm530, %v525, %v529
      %v533 = vsel %vm530, %v527, %v523
      %v534 = vsel %vm530, %v529, %v525
      %s535 = scalar_lea.vmem %s3, 2
      %v536 = vld [vmem:[%s535] sm:$0x3]
      %v538 = vperm.slane %v536, 0
      %v539 = vperm.slane %v536, 1
      %v542 = vmul.f32 %v533, %v538
      %v543 = vmul.f32 %v531, %v539
      %v544 = vmul.f32 %v534, %v538
      %v545 = vmul.f32 %v532, %v539
      %546 = vrot.lane.b32.xlu0 %v471, 15
      %v547 = vpop.permute.xlu0 %546
      %548 = vrot.lane.b32.xlu0 %v493, 15
      %v549 = vpop.permute.xlu0 %548
      %550 = vrot.lane.b32.xlu0 %v491, 15
      %v551 = vpop.permute.xlu0 %550
      %552 = vrot.lane.b32.xlu0 %v494, 15
      %v553 = vpop.permute.xlu0 %552
      %vm554 = vcmp.lt.s32.totalorder %v506, 15
      %v555 = vsel %vm554, %v547, %v551
      %v556 = vsel %vm554, %v549, %v553
      %v557 = vsel %vm554, %v551, %v547
      %v558 = vsel %vm554, %v553, %v549
      %s559 = scalar_lea.vmem %s3, 4
      %v560 = vld [vmem:[%s559] sm:$0x3]
      %v562 = vperm.slane %v560, 0
      %v563 = vperm.slane %v560, 1
      %v566 = vmul.f32 %v557, %v562
      %v567 = vmul.f32 %v555, %v563
      %v568 = vmul.f32 %v558, %v562
      %v569 = vmul.f32 %v556, %v563
      %570 = vrot.lane.b32.xlu0 %v471, 1
      %v571 = vpop.permute.xlu0 %570
      %572 = vrot.lane.b32.xlu0 %v493, 1
      %v573 = vpop.permute.xlu0 %572
      %574 = vrot.lane.b32.xlu0 %v491, 1
      %v575 = vpop.permute.xlu0 %574
      %576 = vrot.lane.b32.xlu0 %v494, 1
      %v577 = vpop.permute.xlu0 %576
      %vm578 = vcmp.lt.s32.totalorder %v506, 1
      %v579 = vsel %vm578, %v571, %v575
      %v580 = vsel %vm578, %v573, %v577
      %v581 = vsel %vm578, %v575, %v571
      %v582 = vsel %vm578, %v577, %v573
      %s583 = scalar_lea.vmem %s3, 6
      %v584 = vld [vmem:[%s583] sm:$0x3]
      %v586 = vperm.slane %v584, 0
      %v587 = vperm.slane %v584, 1
      %v590 = vmul.f32 %v581, %v586
      %v591 = vmul.f32 %v579, %v587
      %v592 = vmul.f32 %v582, %v586
      %v593 = vmul.f32 %v580, %v587
      %s594 = scalar_lea.vmem %s3, 8
      %v595 = vld [vmem:[%s594] sm:$0x3]
      %v597 = vperm.slane %v595, 0
      %v598 = vperm.slane %v595, 1
      %v601 = vmul.f32 %v471, %v597
      %v602 = vmul.f32 %v491, %v598
      %v603 = vmul.f32 %v493, %v597
      %v604 = vmul.f32 %v494, %v598
      %605 = vrot.lane.b32.xlu0 %v471, 127
      %v606 = vpop.permute.xlu0 %605
      %607 = vrot.lane.b32.xlu0 %v493, 127
      %v608 = vpop.permute.xlu0 %607
      %609 = vrot.lane.b32.xlu0 %v491, 127
      %v610 = vpop.permute.xlu0 %609
      %611 = vrot.lane.b32.xlu0 %v494, 127
      %v612 = vpop.permute.xlu0 %611
      %vm613 = vcmp.lt.s32.totalorder %v506, 127
      %v614 = vsel %vm613, %v606, %v610
      %v615 = vsel %vm613, %v608, %v612
      %v616 = vsel %vm613, %v610, %v606
      %v617 = vsel %vm613, %v612, %v608
      %s618 = scalar_lea.vmem %s3, 10
      %v619 = vld [vmem:[%s618] sm:$0x3]
      %v621 = vperm.slane %v619, 0
      %v622 = vperm.slane %v619, 1
      %v625 = vmul.f32 %v614, %v621
      %v626 = vmul.f32 %v616, %v622
      %v627 = vmul.f32 %v615, %v621
      %v628 = vmul.f32 %v617, %v622
      %629 = vrot.lane.b32.xlu0 %v471, 113
      %v630 = vpop.permute.xlu0 %629
      %631 = vrot.lane.b32.xlu0 %v493, 113
      %v632 = vpop.permute.xlu0 %631
      %633 = vrot.lane.b32.xlu0 %v491, 113
      %v634 = vpop.permute.xlu0 %633
      %635 = vrot.lane.b32.xlu0 %v494, 113
      %v636 = vpop.permute.xlu0 %635
      %vm637 = vcmp.lt.s32.totalorder %v506, 113
      %v638 = vsel %vm637, %v630, %v634
      %v639 = vsel %vm637, %v632, %v636
      %v640 = vsel %vm637, %v634, %v630
      %v641 = vsel %vm637, %v636, %v632
      %s642 = scalar_lea.vmem %s3, 12
      %v643 = vld [vmem:[%s642] sm:$0x3]
      %v645 = vperm.slane %v643, 0
      %v646 = vperm.slane %v643, 1
      %v649 = vmul.f32 %v638, %v645
      %v650 = vmul.f32 %v640, %v646
      %v651 = vmul.f32 %v639, %v645
      %v652 = vmul.f32 %v641, %v646
      %653 = vrot.lane.b32.xlu0 %v471, 112
      %v654 = vpop.permute.xlu0 %653
      %655 = vrot.lane.b32.xlu0 %v493, 112
      %v656 = vpop.permute.xlu0 %655
      %657 = vrot.lane.b32.xlu0 %v491, 112
      %v658 = vpop.permute.xlu0 %657
      %659 = vrot.lane.b32.xlu0 %v494, 112
      %v660 = vpop.permute.xlu0 %659
      %vm661 = vcmp.lt.s32.totalorder %v506, 112
      %v662 = vsel %vm661, %v654, %v658
      %v663 = vsel %vm661, %v656, %v660
      %v664 = vsel %vm661, %v658, %v654
      %v665 = vsel %vm661, %v660, %v656
      %s666 = scalar_lea.vmem %s3, 14
      %v667 = vld [vmem:[%s666] sm:$0x3]
      %v669 = vperm.slane %v667, 0
      %v670 = vperm.slane %v667, 1
      %v673 = vmul.f32 %v662, %v669
      %v674 = vmul.f32 %v664, %v670
      %v675 = vmul.f32 %v663, %v669
      %v676 = vmul.f32 %v665, %v670
      %677 = vrot.lane.b32.xlu0 %v471, 111
      %v678 = vpop.permute.xlu0 %677
      %679 = vrot.lane.b32.xlu0 %v493, 111
      %v680 = vpop.permute.xlu0 %679
      %681 = vrot.lane.b32.xlu0 %v491, 111
      %v682 = vpop.permute.xlu0 %681
      %683 = vrot.lane.b32.xlu0 %v494, 111
      %v684 = vpop.permute.xlu0 %683
      %vm685 = vcmp.lt.s32.totalorder %v506, 111
      %v686 = vsel %vm685, %v678, %v682
      %v687 = vsel %vm685, %v680, %v684
      %v688 = vsel %vm685, %v682, %v678
      %v689 = vsel %vm685, %v684, %v680
      %s690 = scalar_lea.vmem %s3, 16
      %v691 = vld [vmem:[%s690] sm:$0x3]
      %v693 = vperm.slane %v691, 0
      %v694 = vperm.slane %v691, 1
      %v697 = vmul.f32 %v686, %v693
      %v698 = vmul.f32 %v688, %v694
      %v699 = vmul.f32 %v687, %v693
      %v700 = vmul.f32 %v689, %v694
      %v701 = vpack.c.bf16 %v520, %v518
      %v702 = vpack.c.bf16 %v521, %v519
      %v703 = vpack.c.bf16 %v544, %v542
      %v704 = vpack.c.bf16 %v545, %v543
      %v705 = vpack.c.bf16 %v568, %v566
      %v706 = vpack.c.bf16 %v569, %v567
      %v707 = vpack.c.bf16 %v592, %v590
      %v708 = vpack.c.bf16 %v593, %v591
      %v709 = vpack.c.bf16 %v603, %v601
      %v710 = vpack.c.bf16 %v604, %v602
      %v711 = vpack.c.bf16 %v627, %v625
      %v712 = vpack.c.bf16 %v628, %v626
      %v713 = vpack.c.bf16 %v651, %v649
      %v714 = vpack.c.bf16 %v652, %v650
      %v715 = vpack.c.bf16 %v675, %v673
      %v716 = vpack.c.bf16 %v676, %v674
      %v717 = vpack.c.bf16 %v699, %v697
      %v718 = vpack.c.bf16 %v700, %v698
      %v719 = vld [vmem:[%s5] sm:$0xff]
      %v720 = vld [vmem:[%s5 + $0x8] sm:$0xff]
      %722 = vset.pattern.permute.xlu0 0
      %723 = vperm.xlu0 %722, %v719
      %v724 = vpop.permute.xlu0 %723
      %727 = vset.pattern.permute.xlu0 0
      %728 = vperm.xlu0 %727, %v720
      %v729 = vpop.permute.xlu0 %728
      %v733 = vunpack.c.l.b16 %v495
      %v734 = vunpack.c.h.b16 %v495
      %v735 = vunpack.c.l.b16 %v496
      %v736 = vunpack.c.h.b16 %v496
      %v737 = vpack.c.b16 %v735, %v733
      %v738 = vpack.c.b16 %v736, %v734
      %vm740 = vcmask 130048
      %v742 = vsel %vm740, %v738, 0
      %744 = vmatpush.bf16.msra.mxu0 %v715
      %745 = vmatpush.bf16.msra.mxu0 %v713
      %746 = vmatpush.bf16.msra.mxu0 %v711
      %747 = vmatpush.bf16.msra.mxu0 %v709
      %748 = vmatpush.bf16.msra.mxu0 %v707
      %749 = vmatpush.bf16.msra.mxu0 %v705
      %750 = vmatpush.bf16.msra.mxu0 %v703
      %751 = vmatpush.bf16.msra.mxu0 %v701
      %752 = vmatmul.bf16.gmra.mxu0 %v737
      %v753 = vpop.f32.mrf.mxu0
      %v754 = vadd.f32 %v724, %v753
      %v755 = vpop.f32.mrf.mxu0
      %v756 = vadd.f32 %v729, %v755
      %757 = vdwg.mxu0
      %758 = vmatpush.bf16.msra.mxu0 0
      %759 = vmatpush.bf16.msra.mxu0 0
      %760 = vmatpush.bf16.msra.mxu0 0
      %761 = vmatpush.bf16.msra.mxu0 0
      %762 = vmatpush.bf16.msra.mxu0 0
      %763 = vmatpush.bf16.msra.mxu0 0
      %764 = vmatpush.bf16.msra.mxu0 0
      %765 = vmatpush.bf16.msra.mxu0 %v717
      %766 = vmatmul.bf16.gmra.mxu0 %v742
      %v767 = vpop.f32.mrf.mxu0
      %v768 = vadd.f32 %v754, %v767
      %v769 = vpop.f32.mrf.mxu0
      %v770 = vadd.f32 %v756, %v769
      %771 = vdwg.mxu0
      %772 = vmatpush.bf16.msra.mxu0 %v716
      %773 = vmatpush.bf16.msra.mxu0 %v714
      %774 = vmatpush.bf16.msra.mxu0 %v712
      %775 = vmatpush.bf16.msra.mxu0 %v710
      %776 = vmatpush.bf16.msra.mxu0 %v708
      %777 = vmatpush.bf16.msra.mxu0 %v706
      %778 = vmatpush.bf16.msra.mxu0 %v704
      %779 = vmatpush.bf16.msra.mxu0 %v702
      %780 = vmatmul.bf16.gmra.mxu0 %v737
      %v781 = vpop.f32.mrf.mxu0
      %v782 = vadd.f32 %v724, %v781
      %v783 = vpop.f32.mrf.mxu0
      %v784 = vadd.f32 %v729, %v783
      %785 = vdwg.mxu0
      %786 = vmatpush.bf16.msra.mxu0 0
      %787 = vmatpush.bf16.msra.mxu0 0
      %788 = vmatpush.bf16.msra.mxu0 0
      %789 = vmatpush.bf16.msra.mxu0 0
      %790 = vmatpush.bf16.msra.mxu0 0
      %791 = vmatpush.bf16.msra.mxu0 0
      %792 = vmatpush.bf16.msra.mxu0 0
      %793 = vmatpush.bf16.msra.mxu0 %v718
      %794 = vmatmul.bf16.gmra.mxu0 %v742
      %v795 = vpop.f32.mrf.mxu0
      %v796 = vadd.f32 %v782, %v795
      %v797 = vpop.f32.mrf.mxu0
      %v798 = vadd.f32 %v784, %v797
      %799 = vdwg.mxu0
      %v800 = vmax.f32 %v768, 0.0
      %v801 = vmax.f32 %v796, 0.0
      %v802 = vld [vmem:[%s6] sm:$0xf]
      %803 = vrot.lane.b32.xlu0 %v800, 17
      %v804 = vpop.permute.xlu0 %803
      %805 = vrot.lane.b32.xlu0 %v801, 17
      %v806 = vpop.permute.xlu0 %805
      %v807 = vsel %vm507, %v804, %v806
      %v808 = vsel %vm507, %v806, %v804
      %v809 = vmul.f32 %v808, %v514
      %v810 = vmul.f32 %v807, %v515
      %811 = vrot.lane.b32.xlu0 %v800, 16
      %v812 = vpop.permute.xlu0 %811
      %813 = vrot.lane.b32.xlu0 %v801, 16
      %v814 = vpop.permute.xlu0 %813
      %v815 = vsel %vm530, %v812, %v814
      %v816 = vsel %vm530, %v814, %v812
      %v817 = vmul.f32 %v816, %v538
      %v818 = vmul.f32 %v815, %v539
      %819 = vrot.lane.b32.xlu0 %v800, 15
      %v820 = vpop.permute.xlu0 %819
      %821 = vrot.lane.b32.xlu0 %v801, 15
      %v822 = vpop.permute.xlu0 %821
      %v823 = vsel %vm554, %v820, %v822
      %v824 = vsel %vm554, %v822, %v820
      %v825 = vmul.f32 %v824, %v562
      %v826 = vmul.f32 %v823, %v563
      %827 = vrot.lane.b32.xlu0 %v800, 1
      %v828 = vpop.permute.xlu0 %827
      %829 = vrot.lane.b32.xlu0 %v801, 1
      %v830 = vpop.permute.xlu0 %829
      %v831 = vsel %vm578, %v828, %v830
      %v832 = vsel %vm578, %v830, %v828
      %v833 = vmul.f32 %v832, %v586
      %v834 = vmul.f32 %v831, %v587
      %v835 = vmul.f32 %v800, %v597
      %v836 = vmul.f32 %v801, %v598
      %837 = vrot.lane.b32.xlu0 %v800, 127
      %v838 = vpop.permute.xlu0 %837
      %839 = vrot.lane.b32.xlu0 %v801, 127
      %v840 = vpop.permute.xlu0 %839
      %v841 = vsel %vm613, %v838, %v840
      %v842 = vsel %vm613, %v840, %v838
      %v843 = vmul.f32 %v841, %v621
      %v844 = vmul.f32 %v842, %v622
      %845 = vrot.lane.b32.xlu0 %v800, 113
      %v846 = vpop.permute.xlu0 %845
      %847 = vrot.lane.b32.xlu0 %v801, 113
      %v848 = vpop.permute.xlu0 %847
      %v849 = vsel %vm637, %v846, %v848
      %v850 = vsel %vm637, %v848, %v846
      %v851 = vmul.f32 %v849, %v645
      %v852 = vmul.f32 %v850, %v646
      %853 = vrot.lane.b32.xlu0 %v800, 112
      %v854 = vpop.permute.xlu0 %853
      %855 = vrot.lane.b32.xlu0 %v801, 112
      %v856 = vpop.permute.xlu0 %855
      %v857 = vsel %vm661, %v854, %v856
      %v858 = vsel %vm661, %v856, %v854
      %v859 = vmul.f32 %v857, %v669
      %v860 = vmul.f32 %v858, %v670
      %861 = vrot.lane.b32.xlu0 %v800, 111
      %v862 = vpop.permute.xlu0 %861
      %863 = vrot.lane.b32.xlu0 %v801, 111
      %v864 = vpop.permute.xlu0 %863
      %v865 = vsel %vm685, %v862, %v864
      %v866 = vsel %vm685, %v864, %v862
      %v867 = vmul.f32 %v865, %v693
      %v868 = vmul.f32 %v866, %v694
      %v869 = vpack.c.bf16 %v817, %v809
      %v870 = vpack.c.bf16 %v818, %v810
      %v871 = vpack.c.bf16 %v833, %v825
      %v872 = vpack.c.bf16 %v834, %v826
      %v873 = vpack.c.bf16 %v843, %v835
      %v874 = vpack.c.bf16 %v844, %v836
      %v875 = vpack.c.bf16 %v859, %v851
      %v876 = vpack.c.bf16 %v860, %v852
      %v877 = vpack.c.bf16 %v867, %v867
      %v878 = vpack.c.bf16 %v868, %v868
      %v879 = vld [vmem:[%s7] sm:$0xff]
      %881 = vset.pattern.permute.xlu0 0
      %882 = vperm.xlu0 %881, %v879
      %v883 = vpop.permute.xlu0 %882
      %vm885 = vcmask 588800
      %v887 = vsel %vm885, %v802, 0
      %vm889 = vcmask 1043456
      %v891 = vsel %vm889, %v877, 0
      %v894 = vsel %vm889, %v878, 0
      %896 = vmatpush.bf16.msra.mxu0 0
      %897 = vmatpush.bf16.msra.mxu0 0
      %898 = vmatpush.bf16.msra.mxu0 0
      %899 = vmatpush.bf16.msra.mxu0 %v891
      %900 = vmatpush.bf16.msra.mxu0 %v875
      %901 = vmatpush.bf16.msra.mxu0 %v873
      %902 = vmatpush.bf16.msra.mxu0 %v871
      %903 = vmatpush.bf16.msra.mxu0 %v869
      %904 = vmatmul.bf16.gmra.mxu0 %v887
      %v905 = vpop.f32.mrf.mxu0
      %v906 = vadd.f32 %v883, %v905
      %v907 = vpop.f32.mrf.mxu0
      %908 = vdwg.mxu0
      %909 = vmatpush.bf16.msra.mxu0 0
      %910 = vmatpush.bf16.msra.mxu0 0
      %911 = vmatpush.bf16.msra.mxu0 0
      %912 = vmatpush.bf16.msra.mxu0 %v894
      %913 = vmatpush.bf16.msra.mxu0 %v876
      %914 = vmatpush.bf16.msra.mxu0 %v874
      %915 = vmatpush.bf16.msra.mxu0 %v872
      %916 = vmatpush.bf16.msra.mxu0 %v870
      %917 = vmatmul.bf16.gmra.mxu0 %v887
      %v918 = vpop.f32.mrf.mxu0
      %v919 = vadd.f32 %v883, %v918
      %v920 = vpop.f32.mrf.mxu0
      %921 = vdwg.mxu0
      %v922 = vadd.f32 %v906, %v770
      %v923 = vadd.f32 %v919, %v798
      %v924 = vmax.f32 %v922, 0.0
      %v925 = vmax.f32 %v923, 0.0
      %v926 = vld [vmem:[%s8] sm:$0xf]
      %v927 = vld [vmem:[%s8 + $0x4] sm:$0xf]
      %928 = vrot.lane.b32.xlu0 %v924, 17
      %v929 = vpop.permute.xlu0 %928
      %930 = vrot.lane.b32.xlu0 %v925, 17
      %v931 = vpop.permute.xlu0 %930
      %v932 = vsel %vm507, %v929, %v931
      %v933 = vsel %vm507, %v931, %v929
      %v934 = vmul.f32 %v933, %v514
      %v935 = vmul.f32 %v932, %v515
      %936 = vrot.lane.b32.xlu0 %v924, 16
      %v937 = vpop.permute.xlu0 %936
      %938 = vrot.lane.b32.xlu0 %v925, 16
      %v939 = vpop.permute.xlu0 %938
      %v940 = vsel %vm530, %v937, %v939
      %v941 = vsel %vm530, %v939, %v937
      %v942 = vmul.f32 %v941, %v538
      %v943 = vmul.f32 %v940, %v539
      %944 = vrot.lane.b32.xlu0 %v924, 15
      %v945 = vpop.permute.xlu0 %944
      %946 = vrot.lane.b32.xlu0 %v925, 15
      %v947 = vpop.permute.xlu0 %946
      %v948 = vsel %vm554, %v945, %v947
      %v949 = vsel %vm554, %v947, %v945
      %v950 = vmul.f32 %v949, %v562
      %v951 = vmul.f32 %v948, %v563
      %952 = vrot.lane.b32.xlu0 %v924, 1
      %v953 = vpop.permute.xlu0 %952
      %954 = vrot.lane.b32.xlu0 %v925, 1
      %v955 = vpop.permute.xlu0 %954
      %v956 = vsel %vm578, %v953, %v955
      %v957 = vsel %vm578, %v955, %v953
      %v958 = vmul.f32 %v957, %v586
      %v959 = vmul.f32 %v956, %v587
      %v960 = vmul.f32 %v924, %v597
      %v961 = vmul.f32 %v925, %v598
      %962 = vrot.lane.b32.xlu0 %v924, 127
      %v963 = vpop.permute.xlu0 %962
      %964 = vrot.lane.b32.xlu0 %v925, 127
      %v965 = vpop.permute.xlu0 %964
      %v966 = vsel %vm613, %v963, %v965
      %v967 = vsel %vm613, %v965, %v963
      %v968 = vmul.f32 %v966, %v621
      %v969 = vmul.f32 %v967, %v622
      %970 = vrot.lane.b32.xlu0 %v924, 113
      %v971 = vpop.permute.xlu0 %970
      %972 = vrot.lane.b32.xlu0 %v925, 113
      %v973 = vpop.permute.xlu0 %972
      %v974 = vsel %vm637, %v971, %v973
      %v975 = vsel %vm637, %v973, %v971
      %v976 = vmul.f32 %v974, %v645
      %v977 = vmul.f32 %v975, %v646
      %978 = vrot.lane.b32.xlu0 %v924, 112
      %v979 = vpop.permute.xlu0 %978
      %980 = vrot.lane.b32.xlu0 %v925, 112
      %v981 = vpop.permute.xlu0 %980
      %v982 = vsel %vm661, %v979, %v981
      %v983 = vsel %vm661, %v981, %v979
      %v984 = vmul.f32 %v982, %v669
      %v985 = vmul.f32 %v983, %v670
      %986 = vrot.lane.b32.xlu0 %v924, 111
      %v987 = vpop.permute.xlu0 %986
      %988 = vrot.lane.b32.xlu0 %v925, 111
      %v989 = vpop.permute.xlu0 %988
      %v990 = vsel %vm685, %v987, %v989
      %v991 = vsel %vm685, %v989, %v987
      %v992 = vmul.f32 %v990, %v693
      %v993 = vmul.f32 %v991, %v694
      %v994 = vpack.c.bf16 %v942, %v934
      %v995 = vpack.c.bf16 %v943, %v935
      %v996 = vpack.c.bf16 %v958, %v950
      %v997 = vpack.c.bf16 %v959, %v951
      %v998 = vpack.c.bf16 %v968, %v960
      %v999 = vpack.c.bf16 %v969, %v961
      %v1000 = vpack.c.bf16 %v984, %v976
      %v1001 = vpack.c.bf16 %v985, %v977
      %v1002 = vpack.c.bf16 %v992, %v992
      %v1003 = vpack.c.bf16 %v993, %v993
      %v1004 = vld [vmem:[%s9] sm:$0xff]
      %v1005 = vld [vmem:[%s9 + $0x8] sm:$0xff]
      %1007 = vset.pattern.permute.xlu0 0
      %1008 = vperm.xlu0 %1007, %v1004
      %v1009 = vpop.permute.xlu0 %1008
      %1012 = vset.pattern.permute.xlu0 0
      %1013 = vperm.xlu0 %1012, %v1005
      %v1014 = vpop.permute.xlu0 %1013
      %v1018 = vunpack.c.l.b16 %v926
      %v1019 = vunpack.c.l.b16 %v927
      %v1020 = vpack.c.b16 %v1019, %v1018
      %v1022 = vsel %vm885, %v1020, 0
      %v1025 = vsel %vm889, %v1002, 0
      %v1028 = vsel %vm889, %v1003, 0
      %1030 = vmatpush.bf16.msra.mxu0 0
      %1031 = vmatpush.bf16.msra.mxu0 0
      %1032 = vmatpush.bf16.msra.mxu0 0
      %1033 = vmatpush.bf16.msra.mxu0 %v1025
      %1034 = vmatpush.bf16.msra.mxu0 %v1000
      %1035 = vmatpush.bf16.msra.mxu0 %v998
      %1036 = vmatpush.bf16.msra.mxu0 %v996
      %1037 = vmatpush.bf16.msra.mxu0 %v994
      %1038 = vmatmul.bf16.gmra.mxu0 %v1022
      %v1039 = vpop.f32.mrf.mxu0
      %v1040 = vadd.f32 %v1009, %v1039
      %v1041 = vpop.f32.mrf.mxu0
      %v1042 = vadd.f32 %v1014, %v1041
      %1043 = vdwg.mxu0
      %1044 = vmatpush.bf16.msra.mxu0 0
      %1045 = vmatpush.bf16.msra.mxu0 0
      %1046 = vmatpush.bf16.msra.mxu0 0
      %1047 = vmatpush.bf16.msra.mxu0 %v1028
      %1048 = vmatpush.bf16.msra.mxu0 %v1001
      %1049 = vmatpush.bf16.msra.mxu0 %v999
      %1050 = vmatpush.bf16.msra.mxu0 %v997
      %1051 = vmatpush.bf16.msra.mxu0 %v995
      %1052 = vmatmul.bf16.gmra.mxu0 %v1022
      %v1053 = vpop.f32.mrf.mxu0
      %v1054 = vadd.f32 %v1009, %v1053
      %v1055 = vpop.f32.mrf.mxu0
      %v1056 = vadd.f32 %v1014, %v1055
      %1057 = vdwg.mxu0
      %v1058 = vmax.f32 %v1040, 0.0
      %v1059 = vmax.f32 %v1054, 0.0
      %v1060 = vld [vmem:[%s10] sm:$0xf]
      %1061 = vrot.lane.b32.xlu0 %v1058, 17
      %v1062 = vpop.permute.xlu0 %1061
      %1063 = vrot.lane.b32.xlu0 %v1059, 17
      %v1064 = vpop.permute.xlu0 %1063
      %v1065 = vsel %vm507, %v1062, %v1064
      %v1066 = vsel %vm507, %v1064, %v1062
      %v1067 = vmul.f32 %v1066, %v514
      %v1068 = vmul.f32 %v1065, %v515
      %1069 = vrot.lane.b32.xlu0 %v1058, 16
      %v1070 = vpop.permute.xlu0 %1069
      %1071 = vrot.lane.b32.xlu0 %v1059, 16
      %v1072 = vpop.permute.xlu0 %1071
      %v1073 = vsel %vm530, %v1070, %v1072
      %v1074 = vsel %vm530, %v1072, %v1070
      %v1075 = vmul.f32 %v1074, %v538
      %v1076 = vmul.f32 %v1073, %v539
      %1077 = vrot.lane.b32.xlu0 %v1058, 15
      %v1078 = vpop.permute.xlu0 %1077
      %1079 = vrot.lane.b32.xlu0 %v1059, 15
      %v1080 = vpop.permute.xlu0 %1079
      %v1081 = vsel %vm554, %v1078, %v1080
      %v1082 = vsel %vm554, %v1080, %v1078
      %v1083 = vmul.f32 %v1082, %v562
      %v1084 = vmul.f32 %v1081, %v563
      %1085 = vrot.lane.b32.xlu0 %v1058, 1
      %v1086 = vpop.permute.xlu0 %1085
      %1087 = vrot.lane.b32.xlu0 %v1059, 1
      %v1088 = vpop.permute.xlu0 %1087
      %v1089 = vsel %vm578, %v1086, %v1088
      %v1090 = vsel %vm578, %v1088, %v1086
      %v1091 = vmul.f32 %v1090, %v586
      %v1092 = vmul.f32 %v1089, %v587
      %v1093 = vmul.f32 %v1058, %v597
      %v1094 = vmul.f32 %v1059, %v598
      %1095 = vrot.lane.b32.xlu0 %v1058, 127
      %v1096 = vpop.permute.xlu0 %1095
      %1097 = vrot.lane.b32.xlu0 %v1059, 127
      %v1098 = vpop.permute.xlu0 %1097
      %v1099 = vsel %vm613, %v1096, %v1098
      %v1100 = vsel %vm613, %v1098, %v1096
      %v1101 = vmul.f32 %v1099, %v621
      %v1102 = vmul.f32 %v1100, %v622
      %1103 = vrot.lane.b32.xlu0 %v1058, 113
      %v1104 = vpop.permute.xlu0 %1103
      %1105 = vrot.lane.b32.xlu0 %v1059, 113
      %v1106 = vpop.permute.xlu0 %1105
      %v1107 = vsel %vm637, %v1104, %v1106
      %v1108 = vsel %vm637, %v1106, %v1104
      %v1109 = vmul.f32 %v1107, %v645
      %v1110 = vmul.f32 %v1108, %v646
      %1111 = vrot.lane.b32.xlu0 %v1058, 112
      %v1112 = vpop.permute.xlu0 %1111
      %1113 = vrot.lane.b32.xlu0 %v1059, 112
      %v1114 = vpop.permute.xlu0 %1113
      %v1115 = vsel %vm661, %v1112, %v1114
      %v1116 = vsel %vm661, %v1114, %v1112
      %v1117 = vmul.f32 %v1115, %v669
      %v1118 = vmul.f32 %v1116, %v670
      %1119 = vrot.lane.b32.xlu0 %v1058, 111
      %v1120 = vpop.permute.xlu0 %1119
      %1121 = vrot.lane.b32.xlu0 %v1059, 111
      %v1122 = vpop.permute.xlu0 %1121
      %v1123 = vsel %vm685, %v1120, %v1122
      %v1124 = vsel %vm685, %v1122, %v1120
      %v1125 = vmul.f32 %v1123, %v693
      %v1126 = vmul.f32 %v1124, %v694
      %v1127 = vpack.c.bf16 %v1075, %v1067
      %v1128 = vpack.c.bf16 %v1076, %v1068
      %v1129 = vpack.c.bf16 %v1091, %v1083
      %v1130 = vpack.c.bf16 %v1092, %v1084
      %v1131 = vpack.c.bf16 %v1101, %v1093
      %v1132 = vpack.c.bf16 %v1102, %v1094
      %v1133 = vpack.c.bf16 %v1117, %v1109
      %v1134 = vpack.c.bf16 %v1118, %v1110
      %v1135 = vpack.c.bf16 %v1125, %v1125
      %v1136 = vpack.c.bf16 %v1126, %v1126
      %v1137 = vld [vmem:[%s11] sm:$0xff]
      %1139 = vset.pattern.permute.xlu0 0
      %1140 = vperm.xlu0 %1139, %v1137
      %v1141 = vpop.permute.xlu0 %1140
      %v1144 = vsel %vm885, %v1060, 0
      %v1147 = vsel %vm889, %v1135, 0
      %v1150 = vsel %vm889, %v1136, 0
      %1152 = vmatpush.bf16.msra.mxu0 0
      %1153 = vmatpush.bf16.msra.mxu0 0
      %1154 = vmatpush.bf16.msra.mxu0 0
      %1155 = vmatpush.bf16.msra.mxu0 %v1147
      %1156 = vmatpush.bf16.msra.mxu0 %v1133
      %1157 = vmatpush.bf16.msra.mxu0 %v1131
      %1158 = vmatpush.bf16.msra.mxu0 %v1129
      %1159 = vmatpush.bf16.msra.mxu0 %v1127
      %1160 = vmatmul.bf16.gmra.mxu0 %v1144
      %v1161 = vpop.f32.mrf.mxu0
      %v1162 = vadd.f32 %v1141, %v1161
      %v1163 = vpop.f32.mrf.mxu0
      %1164 = vdwg.mxu0
      %1165 = vmatpush.bf16.msra.mxu0 0
      %1166 = vmatpush.bf16.msra.mxu0 0
      %1167 = vmatpush.bf16.msra.mxu0 0
      %1168 = vmatpush.bf16.msra.mxu0 %v1150
      %1169 = vmatpush.bf16.msra.mxu0 %v1134
      %1170 = vmatpush.bf16.msra.mxu0 %v1132
      %1171 = vmatpush.bf16.msra.mxu0 %v1130
      %1172 = vmatpush.bf16.msra.mxu0 %v1128
      %1173 = vmatmul.bf16.gmra.mxu0 %v1144
      %v1174 = vpop.f32.mrf.mxu0
      %v1175 = vadd.f32 %v1141, %v1174
      %v1176 = vpop.f32.mrf.mxu0
      %1177 = vdwg.mxu0
      %v1178 = vadd.f32 %v1162, %v1042
      %v1179 = vadd.f32 %v1175, %v1056
      %v1180 = vmax.f32 %v1178, 0.0
      %v1181 = vmax.f32 %v1179, 0.0
      %1182 = vst [vmem:[%s430] sm:$0xff] %v1180
      %1183 = vst [vmem:[%s430 + $0x8] sm:$0xff] %v1181
      %p1184 = scmp.lt.s32.totalorder %s23, 1
      %s1185 = scalar_select %p1184, %s23, 1
      %s1186 = smul.addr %s1185, 2
      %s1187 = smul.addr %s1186, 8
      %s1188 = scalar_lea.vmem %s12, %s1187
      // Predicated region
      $region69: #{decoder_block.1} parent=67 // pred_check
        %p1189 = pneg %p303
      $region70: #{decoder_block.1} parent=67 // pred_check_branch
        %1191 = sbr.rel (%p1189) target = $region72
      $region71: #{decoder_block.1} parent=67 // pred_region
        _
      $region72: #{decoder_block.1} parent=67 // pred_fallthru
        _
    $region68: #{decoder_block.1} parent=5 // pred_fallthru
      _
    %p1192 = scmp.le.s32.totalorder 2, %s18
    // Predicated region
    $region73: #{decoder_block.1} parent=5 // pred_check
      %p1193 = pneg %p1192
    $region74: #{decoder_block.1} parent=5 // pred_check_branch
      %1195 = sbr.rel (%p1193) target = $region76
    $region75: #{decoder_block.1} parent=5 // pred_region
      %s1196 = ssub.s32 %s18, 2
      // Predicated region
      $region77: #{decoder_block.1} parent=75 // pred_check
        %p1197 = pneg %p309
      $region78: #{decoder_block.1} parent=75 // pred_check_branch
        %1199 = sbr.rel (%p1197) target = $region80
      $region79: #{decoder_block.1} parent=75 // pred_region
        %p1200 = scmp.lt.s32.totalorder %s24, 1
        %s1201 = scalar_select %p1200, %s24, 1
        %s1202 = smul.addr %s1201, 2
        %s1203 = smul.addr %s1202, 8
        %s1204 = scalar_lea.vmem %s12, %s1203
      $region80: #{decoder_block.1} parent=75 // pred_fallthru
        _
    $region76: #{decoder_block.1} parent=5 // pred_fallthru
      _
  $region6: #{decoder_block.1} parent=0 // loop_footer
    %s22 = sadd.s32 1, %s18
  $region7: #{decoder_block.1} parent=0 // loop_footer_branch
    %17 = sbr.rel target = $region3
  $region8: #{decoder_block.1} parent=0 // loop_exit
    _

</llo_original>
